<compile_context>
chip_gen: v7x
topology: tpu7x:2x2x1
jax: 0.10.0
libtpu: 0.0.40
codegen_flags: <defaults>
</compile_context>

<pallas_src>
import functools

import jax
import jax.numpy as jnp
from jax.experimental import pallas as pl
from jax.experimental.pallas import tpu as pltpu

CHANNELS = 1
IMAGE_SIZE = 28
LATENT_DIM = 100
LATENT_PAD = 128                       # pad layer-1 K to a full lane tile
H1, H2, H3 = 128, 256, 512
OUT_DIM = IMAGE_SIZE * IMAGE_SIZE * CHANNELS   # 784
OUT_PAD = 896                          # 7 * 128 -> lane-dense output stores
BN_EPS = 1e-5
LEAKY_SLOPE = 0.2


def _leaky_relu(x):
    return jnp.where(x > 0, x, LEAKY_SLOPE * x)


def generator_kernel(
    z_ref,
    w1_ref, b1_ref,
    w2_ref, b2_ref, g2_ref, be2_ref,
    w3_ref, b3_ref, g3_ref, be3_ref,
    w4_ref, b4_ref,
    out_ref,
    *,
    n_real: int,
):
    bp = out_ref.shape[0]
    # Row mask so BatchNorm statistics only cover the real (un-padded) rows.
    row_ids = jax.lax.broadcasted_iota(jnp.int32, (bp, 1), 0)
    mask = (row_ids < n_real).astype(jnp.float32)
    inv_n = jnp.float32(1.0 / n_real)

    def batchnorm(x, gamma, beta):
        # Training-mode BatchNorm1d: batch mean + biased variance (eps=1e-5).
        mean = jnp.sum(x * mask, axis=0, keepdims=True) * inv_n
        centered = x - mean
        var = jnp.sum(centered * centered * mask, axis=0, keepdims=True) * inv_n
        inv_std = jax.lax.rsqrt(var + BN_EPS)
        return centered * inv_std * gamma + beta

    # Layer 1: Linear(100->128) + LeakyReLU(0.2)   (z already bf16, K padded)
    x = jnp.dot(z_ref[...], w1_ref[...], preferred_element_type=jnp.float32)
    x = _leaky_relu(x + b1_ref[...])

    # Layer 2: Linear(128->256) + BatchNorm1d + LeakyReLU(0.2)
    x = jnp.dot(x.astype(jnp.bfloat16), w2_ref[...],
                preferred_element_type=jnp.float32) + b2_ref[...]
    x = _leaky_relu(batchnorm(x, g2_ref[...], be2_ref[...]))

    # Layer 3: Linear(256->512) + BatchNorm1d + LeakyReLU(0.2)
    x = jnp.dot(x.astype(jnp.bfloat16), w3_ref[...],
                preferred_element_type=jnp.float32) + b3_ref[...]
    x = _leaky_relu(batchnorm(x, g3_ref[...], be3_ref[...]))

    # Layer 4: Linear(512->784, padded to 896) + Tanh
    x = jnp.dot(x.astype(jnp.bfloat16), w4_ref[...],
                preferred_element_type=jnp.float32) + b4_ref[...]
    out_ref[...] = jnp.tanh(x)


def _full_spec(shape):
    # Whole-array block (no grid): index_map takes no grid arguments.
    return pl.BlockSpec(shape, lambda: (0,) * len(shape))


def _round_up(x, m):
    return ((x + m - 1) // m) * m


@jax.jit
def generator_forward(z, params):
    """z: (B, LATENT_DIM) f32 -> img: (B, CHANNELS, IMAGE_SIZE, IMAGE_SIZE)."""
    b = z.shape[0]
    bp = max(16, _round_up(b, 16))     # full bf16 (16,128) vreg tiles in M

    # Zero-pad z to (bp, 128) and cast to bf16 (padding columns stay zero).
    zp = jnp.zeros((bp, LATENT_PAD), jnp.float32)
    zp = zp.at[:b, :LATENT_DIM].set(z).astype(jnp.bfloat16)

    # Zero-pad w1 rows (latent) and w4/b4 columns (output) to lane multiples.
    w1 = jnp.zeros((LATENT_PAD, H1), jnp.float32).at[:LATENT_DIM].set(params["w1"])
    w4 = jnp.zeros((H3, OUT_PAD), jnp.float32).at[:, :OUT_DIM].set(params["w4"])
    b4 = jnp.zeros((1, OUT_PAD), jnp.float32).at[:, :OUT_DIM].set(params["b4"])

    args = (
        zp,
        w1.astype(jnp.bfloat16), params["b1"],
        params["w2"].astype(jnp.bfloat16), params["b2"], params["g2"], params["be2"],
        params["w3"].astype(jnp.bfloat16), params["b3"], params["g3"], params["be3"],
        w4.astype(jnp.bfloat16), b4,
    )

    kernel = functools.partial(generator_kernel, n_real=b)
    flat = pl.pallas_call(
        kernel,
        out_shape=jax.ShapeDtypeStruct((bp, OUT_PAD), jnp.float32),
        in_specs=[_full_spec(a.shape) for a in args],
        out_specs=_full_spec((bp, OUT_PAD)),
        compiler_params=pltpu.CompilerParams(vmem_limit_bytes=16 << 20),
    )(*args)

    # Drop batch/output padding and reshape to NCHW like img.view(B,1,28,28).
    return flat[:b, :OUT_DIM].reshape(b, CHANNELS, IMAGE_SIZE, IMAGE_SIZE)


def init_params(key):
    """Deterministic init mirroring PyTorch nn.Linear / nn.BatchNorm1d defaults."""
    def linear(key, fan_in, fan_out):
        kw, kb = jax.random.split(key)
        bound = 1.0 / jnp.sqrt(jnp.float32(fan_in))
        w = jax.random.uniform(kw, (fan_in, fan_out), jnp.float32, -bound, bound)
        b_ = jax.random.uniform(kb, (1, fan_out), jnp.float32, -bound, bound)
        return w, b_

    k1, k2, k3, k4 = jax.random.split(key, 4)
    w1, b1 = linear(k1, LATENT_DIM, H1)
    w2, b2 = linear(k2, H1, H2)
    w3, b3 = linear(k3, H2, H3)
    w4, b4 = linear(k4, H3, OUT_DIM)
    return {
        "w1": w1, "b1": b1,
        "w2": w2, "b2": b2,
        "g2": jnp.ones((1, H2), jnp.float32), "be2": jnp.zeros((1, H2), jnp.float32),
        "w3": w3, "b3": b3,
        "g3": jnp.ones((1, H3), jnp.float32), "be3": jnp.zeros((1, H3), jnp.float32),
        "w4": w4, "b4": b4,
    }


def _bn_ref(x, gamma, beta):
    mean = jnp.mean(x, axis=0, keepdims=True)
    centered = x - mean
    var = jnp.mean(centered * centered, axis=0, keepdims=True)
    return centered * jax.lax.rsqrt(var + BN_EPS) * gamma + beta


def _reference_forward_bf16(z, p):
    """Pure-JAX reference that mirrors the kernel's bf16-matmul / f32-accum math."""
    bf = jnp.bfloat16
    x = jnp.dot(z.astype(bf), p["w1"].astype(bf), preferred_element_type=jnp.float32)
    x = _leaky_relu(x + p["b1"])
    x = jnp.dot(x.astype(bf), p["w2"].astype(bf),
                preferred_element_type=jnp.float32) + p["b2"]
    x = _leaky_relu(_bn_ref(x, p["g2"], p["be2"]))
    x = jnp.dot(x.astype(bf), p["w3"].astype(bf),
                preferred_element_type=jnp.float32) + p["b3"]
    x = _leaky_relu(_bn_ref(x, p["g3"], p["be3"]))
    x = jnp.dot(x.astype(bf), p["w4"].astype(bf),
                preferred_element_type=jnp.float32) + p["b4"]
    return jnp.tanh(x).reshape(z.shape[0], CHANNELS, IMAGE_SIZE, IMAGE_SIZE)


def _reference_forward_f32(z, p):
    """Full-f32 reference of the original PyTorch semantics (loose check)."""
    x = _leaky_relu(z @ p["w1"] + p["b1"])
    x = _leaky_relu(_bn_ref(x @ p["w2"] + p["b2"], p["g2"], p["be2"]))
    x = _leaky_relu(_bn_ref(x @ p["w3"] + p["b3"], p["g3"], p["be3"]))
    x = jnp.tanh(x @ p["w4"] + p["b4"])
    return x.reshape(z.shape[0], CHANNELS, IMAGE_SIZE, IMAGE_SIZE)


if __name__ == "__main__":
    key = jax.random.PRNGKey(0)
    k_params, k_z = jax.random.split(key)
    params = init_params(k_params)

    batch = 8
    z = jax.random.normal(k_z, (batch, LATENT_DIM), jnp.float32)

    img = jax.block_until_ready(generator_forward(z, params))
    assert img.shape == (batch, CHANNELS, IMAGE_SIZE, IMAGE_SIZE), img.shape

    # Strict check against a reference using the same bf16-matmul precision.
    ref_bf16 = _reference_forward_bf16(z, params)
    assert jnp.allclose(img, ref_bf16, atol=1e-3, rtol=1e-3), "mismatch vs bf16 reference"

    # Loose semantic check against the pure-f32 PyTorch-equivalent math
    # (differences come only from bf16 matmul operands).
    ref_f32 = _reference_forward_f32(z, params)
    assert jnp.allclose(img, ref_f32, atol=1e-1), "mismatch vs f32 reference"

    print("KERNEL_OK")
</pallas_src>

<mosaic_0001>
module attributes {stable_mosaic.version = 11 : i64} {
  func.func @generator_kernel(%arg0: memref<16x128xbf16, #tpu.memory_space<vmem>>, %arg1: memref<128x128xbf16, #tpu.memory_space<vmem>>, %arg2: memref<1x128xf32, #tpu.memory_space<vmem>>, %arg3: memref<128x256xbf16, #tpu.memory_space<vmem>>, %arg4: memref<1x256xf32, #tpu.memory_space<vmem>>, %arg5: memref<1x256xf32, #tpu.memory_space<vmem>>, %arg6: memref<1x256xf32, #tpu.memory_space<vmem>>, %arg7: memref<256x512xbf16, #tpu.memory_space<vmem>>, %arg8: memref<1x512xf32, #tpu.memory_space<vmem>>, %arg9: memref<1x512xf32, #tpu.memory_space<vmem>>, %arg10: memref<1x512xf32, #tpu.memory_space<vmem>>, %arg11: memref<512x896xbf16, #tpu.memory_space<vmem>>, %arg12: memref<1x896xf32, #tpu.memory_space<vmem>>, %arg13: memref<16x896xf32, #tpu.memory_space<vmem>>) attributes {dimension_semantics = [], scalar_prefetch = 0 : i64, scratch_operands = 0 : i64, tpu.core_type = #tpu.core_type<tc>} {
    %0 = tpu.iota {dimensions = array<i32: 0>} : vector<16x1xi32>
    %c8_i32 = arith.constant 8 : i32
    %1 = vector.broadcast %c8_i32 : i32 to vector<16x1xi32>
    %2 = arith.cmpi slt, %0, %1 : vector<16x1xi32>
    %3 = arith.extui %2 : vector<16x1xi1> to vector<16x1xi32>
    %4 = arith.sitofp %3 : vector<16x1xi32> to vector<16x1xf32>
    %c0 = arith.constant 0 : index
    %c0_0 = arith.constant 0 : index
    %5 = vector.load %arg0[%c0, %c0_0] : memref<16x128xbf16, #tpu.memory_space<vmem>>, vector<16x128xbf16>
    %c0_1 = arith.constant 0 : index
    %c0_2 = arith.constant 0 : index
    %6 = vector.load %arg1[%c0_1, %c0_2] : memref<128x128xbf16, #tpu.memory_space<vmem>>, vector<128x128xbf16>
    %cst = arith.constant dense<0.000000e+00> : vector<16x128xf32>
    %7 = tpu.matmul %5, %6, %cst {dimension_numbers = #tpu.dot_dimension_numbers<[1], [0], [0], [1], [0, 0, 1, 1], [], []>} : vector<16x128xbf16>, vector<128x128xbf16>, vector<16x128xf32> -> vector<16x128xf32>
    %c0_3 = arith.constant 0 : index
    %c0_4 = arith.constant 0 : index
    %8 = vector.load %arg2[%c0_3, %c0_4] : memref<1x128xf32, #tpu.memory_space<vmem>>, vector<1x128xf32>
    %9 = vector.broadcast %8 : vector<1x128xf32> to vector<16x128xf32>
    %10 = arith.addf %7, %9 : vector<16x128xf32>
    %cst_5 = arith.constant 0.000000e+00 : f32
    %11 = vector.broadcast %cst_5 : f32 to vector<16x128xf32>
    %12 = arith.cmpf ogt, %10, %11 : vector<16x128xf32>
    %cst_6 = arith.constant 2.000000e-01 : f32
    %13 = vector.broadcast %cst_6 : f32 to vector<16x128xf32>
    %14 = arith.mulf %13, %10 : vector<16x128xf32>
    %15 = arith.select %12, %10, %14 : vector<16x128xi1>, vector<16x128xf32>
    %16 = arith.truncf %15 : vector<16x128xf32> to vector<16x128xbf16>
    %c0_7 = arith.constant 0 : index
    %c0_8 = arith.constant 0 : index
    %17 = vector.load %arg3[%c0_7, %c0_8] : memref<128x256xbf16, #tpu.memory_space<vmem>>, vector<128x256xbf16>
    %cst_9 = arith.constant dense<0.000000e+00> : vector<16x256xf32>
    %18 = tpu.matmul %16, %17, %cst_9 {dimension_numbers = #tpu.dot_dimension_numbers<[1], [0], [0], [1], [0, 0, 1, 1], [], []>} : vector<16x128xbf16>, vector<128x256xbf16>, vector<16x256xf32> -> vector<16x256xf32>
    %c0_10 = arith.constant 0 : index
    %c0_11 = arith.constant 0 : index
    %19 = vector.load %arg4[%c0_10, %c0_11] : memref<1x256xf32, #tpu.memory_space<vmem>>, vector<1x256xf32>
    %20 = vector.broadcast %19 : vector<1x256xf32> to vector<16x256xf32>
    %21 = arith.addf %18, %20 : vector<16x256xf32>
    %c0_12 = arith.constant 0 : index
    %c0_13 = arith.constant 0 : index
    %22 = vector.load %arg5[%c0_12, %c0_13] : memref<1x256xf32, #tpu.memory_space<vmem>>, vector<1x256xf32>
    %c0_14 = arith.constant 0 : index
    %c0_15 = arith.constant 0 : index
    %23 = vector.load %arg6[%c0_14, %c0_15] : memref<1x256xf32, #tpu.memory_space<vmem>>, vector<1x256xf32>
    %24 = vector.broadcast %4 : vector<16x1xf32> to vector<16x256xf32>
    %25 = arith.mulf %21, %24 : vector<16x256xf32>
    %cst_16 = arith.constant dense<0.000000e+00> : vector<256xf32>
    %26 = vector.multi_reduction <add>, %25, %cst_16 [0] : vector<16x256xf32> to vector<256xf32>
    %27 = vector.shape_cast %26 : vector<256xf32> to vector<1x256xf32>
    %cst_17 = arith.constant 1.250000e-01 : f32
    %28 = vector.broadcast %cst_17 : f32 to vector<1x256xf32>
    %29 = arith.mulf %27, %28 : vector<1x256xf32>
    %30 = vector.broadcast %29 : vector<1x256xf32> to vector<16x256xf32>
    %31 = arith.subf %21, %30 : vector<16x256xf32>
    %32 = arith.mulf %31, %31 : vector<16x256xf32>
    %33 = vector.broadcast %4 : vector<16x1xf32> to vector<16x256xf32>
    %34 = arith.mulf %32, %33 : vector<16x256xf32>
    %cst_18 = arith.constant dense<0.000000e+00> : vector<256xf32>
    %35 = vector.multi_reduction <add>, %34, %cst_18 [0] : vector<16x256xf32> to vector<256xf32>
    %36 = vector.shape_cast %35 : vector<256xf32> to vector<1x256xf32>
    %cst_19 = arith.constant 1.250000e-01 : f32
    %37 = vector.broadcast %cst_19 : f32 to vector<1x256xf32>
    %38 = arith.mulf %36, %37 : vector<1x256xf32>
    %cst_20 = arith.constant 9.99999974E-6 : f32
    %39 = vector.broadcast %cst_20 : f32 to vector<1x256xf32>
    %40 = arith.addf %38, %39 : vector<1x256xf32>
    %41 = math.rsqrt %40 : vector<1x256xf32>
    %42 = vector.broadcast %41 : vector<1x256xf32> to vector<16x256xf32>
    %43 = arith.mulf %31, %42 : vector<16x256xf32>
    %44 = vector.broadcast %22 : vector<1x256xf32> to vector<16x256xf32>
    %45 = arith.mulf %43, %44 : vector<16x256xf32>
    %46 = vector.broadcast %23 : vector<1x256xf32> to vector<16x256xf32>
    %47 = arith.addf %45, %46 : vector<16x256xf32>
    %cst_21 = arith.constant 0.000000e+00 : f32
    %48 = vector.broadcast %cst_21 : f32 to vector<16x256xf32>
    %49 = arith.cmpf ogt, %47, %48 : vector<16x256xf32>
    %cst_22 = arith.constant 2.000000e-01 : f32
    %50 = vector.broadcast %cst_22 : f32 to vector<16x256xf32>
    %51 = arith.mulf %50, %47 : vector<16x256xf32>
    %52 = arith.select %49, %47, %51 : vector<16x256xi1>, vector<16x256xf32>
    %53 = arith.truncf %52 : vector<16x256xf32> to vector<16x256xbf16>
    %c0_23 = arith.constant 0 : index
    %c0_24 = arith.constant 0 : index
    %54 = vector.load %arg7[%c0_23, %c0_24] : memref<256x512xbf16, #tpu.memory_space<vmem>>, vector<256x512xbf16>
    %cst_25 = arith.constant dense<0.000000e+00> : vector<16x512xf32>
    %55 = tpu.matmul %53, %54, %cst_25 {dimension_numbers = #tpu.dot_dimension_numbers<[1], [0], [0], [1], [0, 0, 1, 1], [], []>} : vector<16x256xbf16>, vector<256x512xbf16>, vector<16x512xf32> -> vector<16x512xf32>
    %c0_26 = arith.constant 0 : index
    %c0_27 = arith.constant 0 : index
    %56 = vector.load %arg8[%c0_26, %c0_27] : memref<1x512xf32, #tpu.memory_space<vmem>>, vector<1x512xf32>
    %57 = vector.broadcast %56 : vector<1x512xf32> to vector<16x512xf32>
    %58 = arith.addf %55, %57 : vector<16x512xf32>
    %c0_28 = arith.constant 0 : index
    %c0_29 = arith.constant 0 : index
    %59 = vector.load %arg9[%c0_28, %c0_29] : memref<1x512xf32, #tpu.memory_space<vmem>>, vector<1x512xf32>
    %c0_30 = arith.constant 0 : index
    %c0_31 = arith.constant 0 : index
    %60 = vector.load %arg10[%c0_30, %c0_31] : memref<1x512xf32, #tpu.memory_space<vmem>>, vector<1x512xf32>
    %61 = vector.broadcast %4 : vector<16x1xf32> to vector<16x512xf32>
    %62 = arith.mulf %58, %61 : vector<16x512xf32>
    %cst_32 = arith.constant dense<0.000000e+00> : vector<512xf32>
    %63 = vector.multi_reduction <add>, %62, %cst_32 [0] : vector<16x512xf32> to vector<512xf32>
    %64 = vector.shape_cast %63 : vector<512xf32> to vector<1x512xf32>
    %cst_33 = arith.constant 1.250000e-01 : f32
    %65 = vector.broadcast %cst_33 : f32 to vector<1x512xf32>
    %66 = arith.mulf %64, %65 : vector<1x512xf32>
    %67 = vector.broadcast %66 : vector<1x512xf32> to vector<16x512xf32>
    %68 = arith.subf %58, %67 : vector<16x512xf32>
    %69 = arith.mulf %68, %68 : vector<16x512xf32>
    %70 = vector.broadcast %4 : vector<16x1xf32> to vector<16x512xf32>
    %71 = arith.mulf %69, %70 : vector<16x512xf32>
    %cst_34 = arith.constant dense<0.000000e+00> : vector<512xf32>
    %72 = vector.multi_reduction <add>, %71, %cst_34 [0] : vector<16x512xf32> to vector<512xf32>
    %73 = vector.shape_cast %72 : vector<512xf32> to vector<1x512xf32>
    %cst_35 = arith.constant 1.250000e-01 : f32
    %74 = vector.broadcast %cst_35 : f32 to vector<1x512xf32>
    %75 = arith.mulf %73, %74 : vector<1x512xf32>
    %cst_36 = arith.constant 9.99999974E-6 : f32
    %76 = vector.broadcast %cst_36 : f32 to vector<1x512xf32>
    %77 = arith.addf %75, %76 : vector<1x512xf32>
    %78 = math.rsqrt %77 : vector<1x512xf32>
    %79 = vector.broadcast %78 : vector<1x512xf32> to vector<16x512xf32>
    %80 = arith.mulf %68, %79 : vector<16x512xf32>
    %81 = vector.broadcast %59 : vector<1x512xf32> to vector<16x512xf32>
    %82 = arith.mulf %80, %81 : vector<16x512xf32>
    %83 = vector.broadcast %60 : vector<1x512xf32> to vector<16x512xf32>
    %84 = arith.addf %82, %83 : vector<16x512xf32>
    %cst_37 = arith.constant 0.000000e+00 : f32
    %85 = vector.broadcast %cst_37 : f32 to vector<16x512xf32>
    %86 = arith.cmpf ogt, %84, %85 : vector<16x512xf32>
    %cst_38 = arith.constant 2.000000e-01 : f32
    %87 = vector.broadcast %cst_38 : f32 to vector<16x512xf32>
    %88 = arith.mulf %87, %84 : vector<16x512xf32>
    %89 = arith.select %86, %84, %88 : vector<16x512xi1>, vector<16x512xf32>
    %90 = arith.truncf %89 : vector<16x512xf32> to vector<16x512xbf16>
    %c0_39 = arith.constant 0 : index
    %c0_40 = arith.constant 0 : index
    %91 = vector.load %arg11[%c0_39, %c0_40] : memref<512x896xbf16, #tpu.memory_space<vmem>>, vector<512x896xbf16>
    %cst_41 = arith.constant dense<0.000000e+00> : vector<16x896xf32>
    %92 = tpu.matmul %90, %91, %cst_41 {dimension_numbers = #tpu.dot_dimension_numbers<[1], [0], [0], [1], [0, 0, 1, 1], [], []>} : vector<16x512xbf16>, vector<512x896xbf16>, vector<16x896xf32> -> vector<16x896xf32>
    %c0_42 = arith.constant 0 : index
    %c0_43 = arith.constant 0 : index
    %93 = vector.load %arg12[%c0_42, %c0_43] : memref<1x896xf32, #tpu.memory_space<vmem>>, vector<1x896xf32>
    %94 = vector.broadcast %93 : vector<1x896xf32> to vector<16x896xf32>
    %95 = arith.addf %92, %94 : vector<16x896xf32>
    %96 = math.tanh %95 : vector<16x896xf32>
    %c0_44 = arith.constant 0 : index
    %c0_45 = arith.constant 0 : index
    %97 = vector.load %arg13[%c0_44, %c0_45] : memref<16x896xf32, #tpu.memory_space<vmem>>, vector<16x896xf32>
    tpu.vector_store %arg13[%c0_44, %c0_45], %96 {strides = array<i32>} : memref<16x896xf32, #tpu.memory_space<vmem>>, vector<16x896xf32>,
    return
  }
}

</mosaic_0001>

<llo_original>
// kernel: generator_forward.1
$region0: #{generator_forward.1}
  #allocation0 [shape = 'u32[]', space=smem, size = 0x4, offset = 0x4, fixed_abs, tag = 'smem constant byte address 0x4 - core index']
  #allocation1 [shape = 'u32[144,128]{1,0:T(1,128)}', space=vmem, size = 0x12000, scoped, tag = 'internal scratch']
  %s0 = inlined_call_operand.vmem [shape: bf16[16,128], index: 0, kind: input, shape index: {}]
  %s1 = inlined_call_operand.vmem [shape: bf16[128,128], index: 1, kind: input, shape index: {}]
  %s2 = inlined_call_operand.vmem [shape: f32[1,128], index: 2, kind: input, shape index: {}]
  %s3 = inlined_call_operand.vmem [shape: bf16[128,256], index: 3, kind: input, shape index: {}]
  %s4 = inlined_call_operand.vmem [shape: f32[1,256], index: 4, kind: input, shape index: {}]
  %s5 = inlined_call_operand.vmem [shape: f32[1,256], index: 5, kind: input, shape index: {}]
  %s6 = inlined_call_operand.vmem [shape: f32[1,256], index: 6, kind: input, shape index: {}]
  %s7 = inlined_call_operand.vmem [shape: bf16[256,512], index: 7, kind: input, shape index: {}]
  %s8 = inlined_call_operand.vmem [shape: f32[1,512], index: 8, kind: input, shape index: {}]
  %s9 = inlined_call_operand.vmem [shape: f32[1,512], index: 9, kind: input, shape index: {}]
  %s10 = inlined_call_operand.vmem [shape: f32[1,512], index: 10, kind: input, shape index: {}]
  %s11 = inlined_call_operand.vmem [shape: bf16[512,896], index: 11, kind: input, shape index: {}]
  %s12 = inlined_call_operand.vmem [shape: f32[1,896], index: 12, kind: input, shape index: {}]
  %s13 = inlined_call_operand.vmem [shape: f32[16,896], index: 13, kind: output, shape index: {}]
  %s14 = sld [smem:[#allocation0]]
  $region62: #{generator_forward.1} parent=0
    _
  %s16 = ssub.s32 1, %s14
  %s17 = scalar_select 0, %s16, %s14
  // Predicated region
  $region2: #{generator_forward.1} parent=0 // pred_check
    _
  $region3: #{generator_forward.1} parent=0 // pred_check_branch
    %19 = sbr.rel (0) target = $region5
  $region4: #{generator_forward.1} parent=0 // pred_region
    _
  $region5: #{generator_forward.1} parent=0 // pred_fallthru
    _
  // Predicated region
  $region6: #{generator_forward.1} parent=0 // pred_check
    _
  $region7: #{generator_forward.1} parent=0 // pred_check_branch
    %21 = sbr.rel (0) target = $region9
  $region8: #{generator_forward.1} parent=0 // pred_region
    _
  $region9: #{generator_forward.1} parent=0 // pred_fallthru
    _
  // Predicated region
  $region10: #{generator_forward.1} parent=0 // pred_check
    _
  $region11: #{generator_forward.1} parent=0 // pred_check_branch
    %23 = sbr.rel (0) target = $region13
  $region12: #{generator_forward.1} parent=0 // pred_region
    _
  $region13: #{generator_forward.1} parent=0 // pred_fallthru
    _
  // Predicated region
  $region14: #{generator_forward.1} parent=0 // pred_check
    _
  $region15: #{generator_forward.1} parent=0 // pred_check_branch
    %25 = sbr.rel (0) target = $region17
  $region16: #{generator_forward.1} parent=0 // pred_region
    _
  $region17: #{generator_forward.1} parent=0 // pred_fallthru
    _
  // Predicated region
  $region18: #{generator_forward.1} parent=0 // pred_check
    _
  $region19: #{generator_forward.1} parent=0 // pred_check_branch
    %27 = sbr.rel (0) target = $region21
  $region20: #{generator_forward.1} parent=0 // pred_region
    _
  $region21: #{generator_forward.1} parent=0 // pred_fallthru
    _
  // Predicated region
  $region22: #{generator_forward.1} parent=0 // pred_check
    _
  $region23: #{generator_forward.1} parent=0 // pred_check_branch
    %29 = sbr.rel (0) target = $region25
  $region24: #{generator_forward.1} parent=0 // pred_region
    _
  $region25: #{generator_forward.1} parent=0 // pred_fallthru
    _
  // Predicated region
  $region26: #{generator_forward.1} parent=0 // pred_check
    _
  $region27: #{generator_forward.1} parent=0 // pred_check_branch
    %31 = sbr.rel (0) target = $region29
  $region28: #{generator_forward.1} parent=0 // pred_region
    _
  $region29: #{generator_forward.1} parent=0 // pred_fallthru
    _
  // Predicated region
  $region30: #{generator_forward.1} parent=0 // pred_check
    _
  $region31: #{generator_forward.1} parent=0 // pred_check_branch
    %33 = sbr.rel (0) target = $region33
  $region32: #{generator_forward.1} parent=0 // pred_region
    _
  $region33: #{generator_forward.1} parent=0 // pred_fallthru
    _
  // Predicated region
  $region34: #{generator_forward.1} parent=0 // pred_check
    _
  $region35: #{generator_forward.1} parent=0 // pred_check_branch
    %35 = sbr.rel (0) target = $region37
  $region36: #{generator_forward.1} parent=0 // pred_region
    _
  $region37: #{generator_forward.1} parent=0 // pred_fallthru
    _
  // Predicated region
  $region38: #{generator_forward.1} parent=0 // pred_check
    _
  $region39: #{generator_forward.1} parent=0 // pred_check_branch
    %37 = sbr.rel (0) target = $region41
  $region40: #{generator_forward.1} parent=0 // pred_region
    _
  $region41: #{generator_forward.1} parent=0 // pred_fallthru
    _
  // Predicated region
  $region42: #{generator_forward.1} parent=0 // pred_check
    _
  $region43: #{generator_forward.1} parent=0 // pred_check_branch
    %39 = sbr.rel (0) target = $region45
  $region44: #{generator_forward.1} parent=0 // pred_region
    _
  $region45: #{generator_forward.1} parent=0 // pred_fallthru
    _
  // Predicated region
  $region46: #{generator_forward.1} parent=0 // pred_check
    _
  $region47: #{generator_forward.1} parent=0 // pred_check_branch
    %41 = sbr.rel (0) target = $region49
  $region48: #{generator_forward.1} parent=0 // pred_region
    _
  $region49: #{generator_forward.1} parent=0 // pred_fallthru
    _
  // Predicated region
  $region50: #{generator_forward.1} parent=0 // pred_check
    _
  $region51: #{generator_forward.1} parent=0 // pred_check_branch
    %43 = sbr.rel (0) target = $region53
  $region52: #{generator_forward.1} parent=0 // pred_region
    _
  $region53: #{generator_forward.1} parent=0 // pred_fallthru
    _
  %v45 = vlaneseq
  %v46 = vshrl.u32 %v45, 7
  %v47 = vadd.s32 %v46, 8
  %vm48 = vcmp.lt.s32.totalorder %v46, 8
  %vm49 = vcmp.lt.s32.totalorder %v47, 8
  %v50 = vsel %vm48, 1, 0
  %v51 = vsel %vm49, 1, 0
  %v52 = vcvt.s32.f32 %v50
  %v53 = vcvt.s32.f32 %v51
  %v54 = vld [vmem:[%s0] sm:$0xf]
  %v55 = vld [vmem:[%s0 + $0x4] sm:$0xf]
  %v56 = vld [vmem:[%s1] sm:$0xf]
  %v57 = vld [vmem:[%s1 + $0x4] sm:$0xf]
  %v58 = vld [vmem:[%s1 + $0x8] sm:$0xf]
  %v59 = vld [vmem:[%s1 + $0xc] sm:$0xf]
  %v60 = vld [vmem:[%s1 + $0x10] sm:$0xf]
  %v61 = vld [vmem:[%s1 + $0x14] sm:$0xf]
  %v62 = vld [vmem:[%s1 + $0x18] sm:$0xf]
  %v63 = vld [vmem:[%s1 + $0x1c] sm:$0xf]
  %v64 = vld [vmem:[%s1 + $0x20] sm:$0xf]
  %v65 = vld [vmem:[%s1 + $0x24] sm:$0xf]
  %v66 = vld [vmem:[%s1 + $0x28] sm:$0xf]
  %v67 = vld [vmem:[%s1 + $0x2c] sm:$0xf]
  %v68 = vld [vmem:[%s1 + $0x30] sm:$0xf]
  %v69 = vld [vmem:[%s1 + $0x34] sm:$0xf]
  %v70 = vld [vmem:[%s1 + $0x38] sm:$0xf]
  %v71 = vld [vmem:[%s1 + $0x3c] sm:$0xf]
  %v72 = vld [vmem:[%s2] sm:$0x1]
  %v74 = vlaneseq
  %v75 = vshrl.u32 %v74, 7
  %v76 = vsub.s32 0, %v75
  %v77 = vrot.slane %v72, %v76
  %v81 = vunpack.c.l.b16 %v54
  %v82 = vunpack.c.l.b16 %v55
  %v83 = vpack.c.b16 %v82, %v81
  %v101 = vunpack.c.l.b16 %v56
  %v102 = vunpack.c.l.b16 %v57
  %v103 = vunpack.c.l.b16 %v58
  %v104 = vunpack.c.l.b16 %v59
  %v105 = vunpack.c.l.b16 %v60
  %v106 = vunpack.c.l.b16 %v61
  %v107 = vunpack.c.l.b16 %v62
  %v108 = vunpack.c.l.b16 %v63
  %v109 = vunpack.c.l.b16 %v64
  %v110 = vunpack.c.l.b16 %v65
  %v111 = vunpack.c.l.b16 %v66
  %v112 = vunpack.c.l.b16 %v67
  %v113 = vunpack.c.l.b16 %v68
  %v114 = vunpack.c.l.b16 %v69
  %v115 = vunpack.c.l.b16 %v70
  %v116 = vunpack.c.l.b16 %v71
  %v117 = vpack.c.b16 %v102, %v101
  %v118 = vpack.c.b16 %v104, %v103
  %v119 = vpack.c.b16 %v106, %v105
  %v120 = vpack.c.b16 %v108, %v107
  %v121 = vpack.c.b16 %v110, %v109
  %v122 = vpack.c.b16 %v112, %v111
  %v123 = vpack.c.b16 %v114, %v113
  %v124 = vpack.c.b16 %v116, %v115
  %133 = vmatprep.subr.bf16.mxu0 0
  %134 = vmatpush1.bf16.msra.mxu0 %v117
  %135 = vmatprep.subr.bf16.mxu0 0
  %136 = vmatpush1.bf16.msra.mxu0 %v118
  %137 = vmatprep.subr.bf16.mxu0 0
  %138 = vmatpush1.bf16.msra.mxu0 %v119
  %139 = vmatprep.subr.bf16.mxu0 0
  %140 = vmatpush1.bf16.msra.mxu0 %v120
  %141 = vmatprep.subr.bf16.mxu0 0
  %142 = vmatpush1.bf16.msra.mxu0 %v121
  %143 = vmatprep.subr.bf16.mxu0 0
  %144 = vmatpush1.bf16.msra.mxu0 %v122
  %145 = vmatprep.subr.bf16.mxu0 0
  %146 = vmatpush1.bf16.msra.mxu0 %v123
  %147 = vmatprep.subr.bf16.mxu0 0
  %148 = vmatpush1.bf16.msra.mxu0 %v124
  %149 = vmatprep.subr.bf16.mxu0 0
  %150 = vmatpush1.bf16.msra.mxu0 0
  %151 = vmatprep.subr.bf16.mxu0 0
  %152 = vmatpush1.bf16.msra.mxu0 0
  %153 = vmatprep.subr.bf16.mxu0 0
  %154 = vmatpush1.bf16.msra.mxu0 0
  %155 = vmatprep.subr.bf16.mxu0 0
  %156 = vmatpush1.bf16.msra.mxu0 0
  %157 = vmatprep.subr.bf16.mxu0 0
  %158 = vmatpush1.bf16.msra.mxu0 0
  %159 = vmatprep.subr.bf16.mxu0 0
  %160 = vmatpush1.bf16.msra.mxu0 0
  %161 = vmatprep.subr.bf16.mxu0 0
  %162 = vmatpush1.bf16.msra.mxu0 0
  %163 = vmatprep.subr.bf16.mxu0 0
  %164 = vmatpush1.bf16.msra.mxu0 0
  %165 = vmatprep.mubr.bf16.mxu0 0
  %166 = vmatmul.mubr.bf16.gmra.mrb[0].mxu0 %v83
  %v167 = vpop.f32.mrb[0].mxu0
  %v168 = vadd.f32 %v77, %v167
  %v169 = vpop.f32.mrb[0].mxu0
  %v170 = vpop.f32.mrb[0].mxu0
  %v171 = vadd.f32 %v77, %v170
  %v172 = vpop.f32.mrb[0].mxu0
  %173 = vdwg.mxu0
  %vm174 = vcmp.gt.f32.partialorder %v168, 0.0
  %vm175 = vcmp.gt.f32.partialorder %v171, 0.0
  %v176 = vmul.f32 %v168, 0.2
  %v177 = vmul.f32 %v171, 0.2
  %v178 = vsel %vm174, %v168, %v176
  %v179 = vsel %vm175, %v171, %v177
  %v180 = vpack.c.bf16 %v179, %v178
  %v181 = vld [vmem:[%s3] sm:$0xff]
  %v182 = vld [vmem:[%s3 + $0x8] sm:$0xff]
  %v183 = vld [vmem:[%s3 + $0x10] sm:$0xff]
  %v184 = vld [vmem:[%s3 + $0x18] sm:$0xff]
  %v185 = vld [vmem:[%s3 + $0x20] sm:$0xff]
  %v186 = vld [vmem:[%s3 + $0x28] sm:$0xff]
  %v187 = vld [vmem:[%s3 + $0x30] sm:$0xff]
  %v188 = vld [vmem:[%s3 + $0x38] sm:$0xff]
  %v189 = vld [vmem:[%s3 + $0x40] sm:$0xff]
  %v190 = vld [vmem:[%s3 + $0x48] sm:$0xff]
  %v191 = vld [vmem:[%s3 + $0x50] sm:$0xff]
  %v192 = vld [vmem:[%s3 + $0x58] sm:$0xff]
  %v193 = vld [vmem:[%s3 + $0x60] sm:$0xff]
  %v194 = vld [vmem:[%s3 + $0x68] sm:$0xff]
  %v195 = vld [vmem:[%s3 + $0x70] sm:$0xff]
  %v196 = vld [vmem:[%s3 + $0x78] sm:$0xff]
  %v197 = vld [vmem:[%s4] sm:$0x3]
  %v199 = vlaneseq
  %v200 = vshrl.u32 %v199, 7
  %v201 = vsub.s32 0, %v200
  %v202 = vrot.slane %v197, %v201
  %v203 = vlaneseq
  %v204 = vshrl.u32 %v203, 7
  %v205 = vsub.s32 1, %v204
  %v206 = vrot.slane %v197, %v205
  %v225 = vunpack.c.l.b16 %v181
  %v226 = vunpack.c.h.b16 %v181
  %v227 = vunpack.c.l.b16 %v182
  %v228 = vunpack.c.h.b16 %v182
  %v229 = vunpack.c.l.b16 %v183
  %v230 = vunpack.c.h.b16 %v183
  %v231 = vunpack.c.l.b16 %v184
  %v232 = vunpack.c.h.b16 %v184
  %v233 = vunpack.c.l.b16 %v185
  %v234 = vunpack.c.h.b16 %v185
  %v235 = vunpack.c.l.b16 %v186
  %v236 = vunpack.c.h.b16 %v186
  %v237 = vunpack.c.l.b16 %v187
  %v238 = vunpack.c.h.b16 %v187
  %v239 = vunpack.c.l.b16 %v188
  %v240 = vunpack.c.h.b16 %v188
  %v241 = vunpack.c.l.b16 %v189
  %v242 = vunpack.c.h.b16 %v189
  %v243 = vunpack.c.l.b16 %v190
  %v244 = vunpack.c.h.b16 %v190
  %v245 = vunpack.c.l.b16 %v191
  %v246 = vunpack.c.h.b16 %v191
  %v247 = vunpack.c.l.b16 %v192
  %v248 = vunpack.c.h.b16 %v192
  %v249 = vunpack.c.l.b16 %v193
  %v250 = vunpack.c.h.b16 %v193
  %v251 = vunpack.c.l.b16 %v194
  %v252 = vunpack.c.h.b16 %v194
  %v253 = vunpack.c.l.b16 %v195
  %v254 = vunpack.c.h.b16 %v195
  %v255 = vunpack.c.l.b16 %v196
  %v256 = vunpack.c.h.b16 %v196
  %v257 = vpack.c.b16 %v227, %v225
  %v258 = vpack.c.b16 %v228, %v226
  %v259 = vpack.c.b16 %v231, %v229
  %v260 = vpack.c.b16 %v232, %v230
  %v261 = vpack.c.b16 %v235, %v233
  %v262 = vpack.c.b16 %v236, %v234
  %v263 = vpack.c.b16 %v239, %v237
  %v264 = vpack.c.b16 %v240, %v238
  %v265 = vpack.c.b16 %v243, %v241
  %v266 = vpack.c.b16 %v244, %v242
  %v267 = vpack.c.b16 %v247, %v245
  %v268 = vpack.c.b16 %v248, %v246
  %v269 = vpack.c.b16 %v251, %v249
  %v270 = vpack.c.b16 %v252, %v250
  %v271 = vpack.c.b16 %v255, %v253
  %v272 = vpack.c.b16 %v256, %v254
  %289 = vmatprep.subr.bf16.mxu0 %v258
  %290 = vmatpush1.bf16.msra.mxu0 %v257
  %291 = vmatprep.subr.bf16.mxu0 %v260
  %292 = vmatpush1.bf16.msra.mxu0 %v259
  %293 = vmatprep.subr.bf16.mxu0 %v262
  %294 = vmatpush1.bf16.msra.mxu0 %v261
  %295 = vmatprep.subr.bf16.mxu0 %v264
  %296 = vmatpush1.bf16.msra.mxu0 %v263
  %297 = vmatprep.subr.bf16.mxu0 %v266
  %298 = vmatpush1.bf16.msra.mxu0 %v265
  %299 = vmatprep.subr.bf16.mxu0 %v268
  %300 = vmatpush1.bf16.msra.mxu0 %v267
  %301 = vmatprep.subr.bf16.mxu0 %v270
  %302 = vmatpush1.bf16.msra.mxu0 %v269
  %303 = vmatprep.subr.bf16.mxu0 %v272
  %304 = vmatpush1.bf16.msra.mxu0 %v271
  %305 = vmatprep.subr.bf16.mxu0 0
  %306 = vmatpush1.bf16.msra.mxu0 0
  %307 = vmatprep.subr.bf16.mxu0 0
  %308 = vmatpush1.bf16.msra.mxu0 0
  %309 = vmatprep.subr.bf16.mxu0 0
  %310 = vmatpush1.bf16.msra.mxu0 0
  %311 = vmatprep.subr.bf16.mxu0 0
  %312 = vmatpush1.bf16.msra.mxu0 0
  %313 = vmatprep.subr.bf16.mxu0 0
  %314 = vmatpush1.bf16.msra.mxu0 0
  %315 = vmatprep.subr.bf16.mxu0 0
  %316 = vmatpush1.bf16.msra.mxu0 0
  %317 = vmatprep.subr.bf16.mxu0 0
  %318 = vmatpush1.bf16.msra.mxu0 0
  %319 = vmatprep.subr.bf16.mxu0 0
  %320 = vmatpush1.bf16.msra.mxu0 0
  %321 = vmatprep.mubr.bf16.mxu0 0
  %322 = vmatmul.mubr.bf16.gmra.mrb[0].mxu0 %v180
  %v323 = vpop.f32.mrb[0].mxu0
  %v324 = vadd.f32 %v202, %v323
  %v325 = vpop.f32.mrb[0].mxu0
  %v326 = vadd.f32 %v206, %v325
  %v327 = vpop.f32.mrb[0].mxu0
  %v328 = vadd.f32 %v202, %v327
  %v329 = vpop.f32.mrb[0].mxu0
  %v330 = vadd.f32 %v206, %v329
  %331 = vdwg.mxu0
  %v332 = vld [vmem:[%s5] sm:$0x3]
  %v333 = vld [vmem:[%s6] sm:$0x3]
  %v334 = vmul.f32 %v324, %v52
  %v335 = vmul.f32 %v326, %v52
  %v336 = vmul.f32 %v328, %v53
  %v337 = vmul.f32 %v330, %v53
  %v338 = vadd.f32 %v334, %v336
  %v339 = vrot.slane %v338, 4
  %v340 = vadd.f32 %v338, %v339
  %v341 = vrot.slane %v340, 2
  %v342 = vadd.f32 %v340, %v341
  %v343 = vrot.slane %v342, 1
  %v344 = vadd.f32 %v342, %v343
  %v345 = vadd.f32 %v335, %v337
  %v346 = vrot.slane %v345, 4
  %v347 = vadd.f32 %v345, %v346
  %v348 = vrot.slane %v347, 2
  %v349 = vadd.f32 %v347, %v348
  %v350 = vrot.slane %v349, 1
  %v351 = vadd.f32 %v349, %v350
  %v352 = vmul.f32 %v344, 0.125
  %v353 = vmul.f32 %v351, 0.125
  %v354 = vsub.f32 %v324, %v352
  %v355 = vsub.f32 %v326, %v353
  %v356 = vsub.f32 %v328, %v352
  %v357 = vsub.f32 %v330, %v353
  %v358 = vmul.f32 %v354, %v354
  %v359 = vmul.f32 %v355, %v355
  %v360 = vmul.f32 %v356, %v356
  %v361 = vmul.f32 %v357, %v357
  %v362 = vmul.f32 %v358, %v52
  %v363 = vmul.f32 %v359, %v52
  %v364 = vmul.f32 %v360, %v53
  %v365 = vmul.f32 %v361, %v53
  %v366 = vadd.f32 %v362, %v364
  %v367 = vrot.slane %v366, 4
  %v368 = vadd.f32 %v366, %v367
  %v369 = vrot.slane %v368, 2
  %v370 = vadd.f32 %v368, %v369
  %v371 = vrot.slane %v370, 1
  %v372 = vadd.f32 %v370, %v371
  %v373 = vadd.f32 %v363, %v365
  %v374 = vrot.slane %v373, 4
  %v375 = vadd.f32 %v373, %v374
  %v376 = vrot.slane %v375, 2
  %v377 = vadd.f32 %v375, %v376
  %v378 = vrot.slane %v377, 1
  %v379 = vadd.f32 %v377, %v378
  %v380 = vmul.f32 %v372, 0.125
  %v381 = vmul.f32 %v379, 0.125
  %v382 = vadd.f32 %v380, 1e-05
  %v383 = vadd.f32 %v381, 1e-05
  %v384 = vrsqrt.pop %v382
  %v385 = vrsqrt.pop %v383
  %v386 = vmul.f32 %v354, %v384
  %v387 = vmul.f32 %v355, %v385
  %v388 = vmul.f32 %v356, %v384
  %v389 = vmul.f32 %v357, %v385
  %v391 = vlaneseq
  %v392 = vshrl.u32 %v391, 7
  %v393 = vsub.s32 0, %v392
  %v394 = vrot.slane %v332, %v393
  %v395 = vlaneseq
  %v396 = vshrl.u32 %v395, 7
  %v397 = vsub.s32 1, %v396
  %v398 = vrot.slane %v332, %v397
  %v401 = vmul.f32 %v386, %v394
  %v402 = vmul.f32 %v387, %v398
  %v403 = vmul.f32 %v388, %v394
  %v404 = vmul.f32 %v389, %v398
  %v406 = vlaneseq
  %v407 = vshrl.u32 %v406, 7
  %v408 = vsub.s32 0, %v407
  %v409 = vrot.slane %v333, %v408
  %v410 = vlaneseq
  %v411 = vshrl.u32 %v410, 7
  %v412 = vsub.s32 1, %v411
  %v413 = vrot.slane %v333, %v412
  %v416 = vadd.f32 %v401, %v409
  %v417 = vadd.f32 %v402, %v413
  %v418 = vadd.f32 %v403, %v409
  %v419 = vadd.f32 %v404, %v413
  %vm420 = vcmp.gt.f32.partialorder %v416, 0.0
  %vm421 = vcmp.gt.f32.partialorder %v417, 0.0
  %vm422 = vcmp.gt.f32.partialorder %v418, 0.0
  %vm423 = vcmp.gt.f32.partialorder %v419, 0.0
  %v424 = vmul.f32 %v416, 0.2
  %v425 = vmul.f32 %v417, 0.2
  %v426 = vmul.f32 %v418, 0.2
  %v427 = vmul.f32 %v419, 0.2
  %v428 = vsel %vm420, %v416, %v424
  %v429 = vsel %vm421, %v417, %v425
  %v430 = vsel %vm422, %v418, %v426
  %v431 = vsel %vm423, %v419, %v427
  %v432 = vpack.c.bf16 %v430, %v428
  %v433 = vpack.c.bf16 %v431, %v429
  %v434 = vld [vmem:[%s7] sm:$0xff]
  %v435 = vld [vmem:[%s7 + $0x8] sm:$0xff]
  %v436 = vld [vmem:[%s7 + $0x10] sm:$0xff]
  %v437 = vld [vmem:[%s7 + $0x18] sm:$0xff]
  %v438 = vld [vmem:[%s7 + $0x20] sm:$0xff]
  %v439 = vld [vmem:[%s7 + $0x28] sm:$0xff]
  %v440 = vld [vmem:[%s7 + $0x30] sm:$0xff]
  %v441 = vld [vmem:[%s7 + $0x38] sm:$0xff]
  %v442 = vld [vmem:[%s7 + $0x40] sm:$0xff]
  %v443 = vld [vmem:[%s7 + $0x48] sm:$0xff]
  %v444 = vld [vmem:[%s7 + $0x50] sm:$0xff]
  %v445 = vld [vmem:[%s7 + $0x58] sm:$0xff]
  %v446 = vld [vmem:[%s7 + $0x60] sm:$0xff]
  %v447 = vld [vmem:[%s7 + $0x68] sm:$0xff]
  %v448 = vld [vmem:[%s7 + $0x70] sm:$0xff]
  %v449 = vld [vmem:[%s7 + $0x78] sm:$0xff]
  %v450 = vld [vmem:[%s7 + $0x80] sm:$0xff]
  %v451 = vld [vmem:[%s7 + $0x88] sm:$0xff]
  %v452 = vld [vmem:[%s7 + $0x90] sm:$0xff]
  %v453 = vld [vmem:[%s7 + $0x98] sm:$0xff]
  %v454 = vld [vmem:[%s7 + $0xa0] sm:$0xff]
  %v455 = vld [vmem:[%s7 + $0xa8] sm:$0xff]
  %v456 = vld [vmem:[%s7 + $0xb0] sm:$0xff]
  %v457 = vld [vmem:[%s7 + $0xb8] sm:$0xff]
  %v458 = vld [vmem:[%s7 + $0xc0] sm:$0xff]
  %v459 = vld [vmem:[%s7 + $0xc8] sm:$0xff]
  %v460 = vld [vmem:[%s7 + $0xd0] sm:$0xff]
  %v461 = vld [vmem:[%s7 + $0xd8] sm:$0xff]
  %v462 = vld [vmem:[%s7 + $0xe0] sm:$0xff]
  %v463 = vld [vmem:[%s7 + $0xe8] sm:$0xff]
  %v464 = vld [vmem:[%s7 + $0xf0] sm:$0xff]
  %v465 = vld [vmem:[%s7 + $0xf8] sm:$0xff]
  %v466 = vld [vmem:[%s7 + $0x100] sm:$0xff]
  %v467 = vld [vmem:[%s7 + $0x108] sm:$0xff]
  %v468 = vld [vmem:[%s7 + $0x110] sm:$0xff]
  %v469 = vld [vmem:[%s7 + $0x118] sm:$0xff]
  %v470 = vld [vmem:[%s7 + $0x120] sm:$0xff]
  %v471 = vld [vmem:[%s7 + $0x128] sm:$0xff]
  %v472 = vld [vmem:[%s7 + $0x130] sm:$0xff]
  %v473 = vld [vmem:[%s7 + $0x138] sm:$0xff]
  %v474 = vld [vmem:[%s7 + $0x140] sm:$0xff]
  %v475 = vld [vmem:[%s7 + $0x148] sm:$0xff]
  %v476 = vld [vmem:[%s7 + $0x150] sm:$0xff]
  %v477 = vld [vmem:[%s7 + $0x158] sm:$0xff]
  %v478 = vld [vmem:[%s7 + $0x160] sm:$0xff]
  %v479 = vld [vmem:[%s7 + $0x168] sm:$0xff]
  %v480 = vld [vmem:[%s7 + $0x170] sm:$0xff]
  %v481 = vld [vmem:[%s7 + $0x178] sm:$0xff]
  %v482 = vld [vmem:[%s7 + $0x180] sm:$0xff]
  %v483 = vld [vmem:[%s7 + $0x188] sm:$0xff]
  %v484 = vld [vmem:[%s7 + $0x190] sm:$0xff]
  %v485 = vld [vmem:[%s7 + $0x198] sm:$0xff]
  %v486 = vld [vmem:[%s7 + $0x1a0] sm:$0xff]
  %v487 = vld [vmem:[%s7 + $0x1a8] sm:$0xff]
  %v488 = vld [vmem:[%s7 + $0x1b0] sm:$0xff]
  %v489 = vld [vmem:[%s7 + $0x1b8] sm:$0xff]
  %v490 = vld [vmem:[%s7 + $0x1c0] sm:$0xff]
  %v491 = vld [vmem:[%s7 + $0x1c8] sm:$0xff]
  %v492 = vld [vmem:[%s7 + $0x1d0] sm:$0xff]
  %v493 = vld [vmem:[%s7 + $0x1d8] sm:$0xff]
  %v494 = vld [vmem:[%s7 + $0x1e0] sm:$0xff]
  %v495 = vld [vmem:[%s7 + $0x1e8] sm:$0xff]
  %v496 = vld [vmem:[%s7 + $0x1f0] sm:$0xff]
  %v497 = vld [vmem:[%s7 + $0x1f8] sm:$0xff]
  %v498 = vld [vmem:[%s8] sm:$0xf]
  %v500 = vlaneseq
  %v501 = vshrl.u32 %v500, 7
  %v502 = vsub.s32 0, %v501
  %v503 = vrot.slane %v498, %v502
  %v504 = vlaneseq
  %v505 = vshrl.u32 %v504, 7
  %v506 = vsub.s32 1, %v505
  %v507 = vrot.slane %v498, %v506
  %v508 = vlaneseq
  %v509 = vshrl.u32 %v508, 7
  %v510 = vsub.s32 2, %v509
  %v511 = vrot.slane %v498, %v510
  %v512 = vlaneseq
  %v513 = vshrl.u32 %v512, 7
  %v514 = vsub.s32 3, %v513
  %v515 = vrot.slane %v498, %v514
  %v584 = vunpack.c.l.b16 %v434
  %v585 = vunpack.c.h.b16 %v434
  %v586 = vunpack.c.l.b16 %v435
  %v587 = vunpack.c.h.b16 %v435
  %v588 = vunpack.c.l.b16 %v436
  %v589 = vunpack.c.h.b16 %v436
  %v590 = vunpack.c.l.b16 %v437
  %v591 = vunpack.c.h.b16 %v437
  %v592 = vunpack.c.l.b16 %v438
  %v593 = vunpack.c.h.b16 %v438
  %v594 = vunpack.c.l.b16 %v439
  %v595 = vunpack.c.h.b16 %v439
  %v596 = vunpack.c.l.b16 %v440
  %v597 = vunpack.c.h.b16 %v440
  %v598 = vunpack.c.l.b16 %v441
  %v599 = vunpack.c.h.b16 %v441
  %v600 = vunpack.c.l.b16 %v442
  %v601 = vunpack.c.h.b16 %v442
  %v602 = vunpack.c.l.b16 %v443
  %v603 = vunpack.c.h.b16 %v443
  %v604 = vunpack.c.l.b16 %v444
  %v605 = vunpack.c.h.b16 %v444
  %v606 = vunpack.c.l.b16 %v445
  %v607 = vunpack.c.h.b16 %v445
  %v608 = vunpack.c.l.b16 %v446
  %v609 = vunpack.c.h.b16 %v446
  %v610 = vunpack.c.l.b16 %v447
  %v611 = vunpack.c.h.b16 %v447
  %v612 = vunpack.c.l.b16 %v448
  %v613 = vunpack.c.h.b16 %v448
  %v614 = vunpack.c.l.b16 %v449
  %v615 = vunpack.c.h.b16 %v449
  %v616 = vunpack.c.l.b16 %v450
  %v617 = vunpack.c.h.b16 %v450
  %v618 = vunpack.c.l.b16 %v451
  %v619 = vunpack.c.h.b16 %v451
  %v620 = vunpack.c.l.b16 %v452
  %v621 = vunpack.c.h.b16 %v452
  %v622 = vunpack.c.l.b16 %v453
  %v623 = vunpack.c.h.b16 %v453
  %v624 = vunpack.c.l.b16 %v454
  %v625 = vunpack.c.h.b16 %v454
  %v626 = vunpack.c.l.b16 %v455
  %v627 = vunpack.c.h.b16 %v455
  %v628 = vunpack.c.l.b16 %v456
  %v629 = vunpack.c.h.b16 %v456
  %v630 = vunpack.c.l.b16 %v457
  %v631 = vunpack.c.h.b16 %v457
  %v632 = vunpack.c.l.b16 %v458
  %v633 = vunpack.c.h.b16 %v458
  %v634 = vunpack.c.l.b16 %v459
  %v635 = vunpack.c.h.b16 %v459
  %v636 = vunpack.c.l.b16 %v460
  %v637 = vunpack.c.h.b16 %v460
  %v638 = vunpack.c.l.b16 %v461
  %v639 = vunpack.c.h.b16 %v461
  %v640 = vunpack.c.l.b16 %v462
  %v641 = vunpack.c.h.b16 %v462
  %v642 = vunpack.c.l.b16 %v463
  %v643 = vunpack.c.h.b16 %v463
  %v644 = vunpack.c.l.b16 %v464
  %v645 = vunpack.c.h.b16 %v464
  %v646 = vunpack.c.l.b16 %v465
  %v647 = vunpack.c.h.b16 %v465
  %v648 = vunpack.c.l.b16 %v466
  %v649 = vunpack.c.h.b16 %v466
  %v650 = vunpack.c.l.b16 %v467
  %v651 = vunpack.c.h.b16 %v467
  %v652 = vunpack.c.l.b16 %v468
  %v653 = vunpack.c.h.b16 %v468
  %v654 = vunpack.c.l.b16 %v469
  %v655 = vunpack.c.h.b16 %v469
  %v656 = vunpack.c.l.b16 %v470
  %v657 = vunpack.c.h.b16 %v470
  %v658 = vunpack.c.l.b16 %v471
  %v659 = vunpack.c.h.b16 %v471
  %v660 = vunpack.c.l.b16 %v472
  %v661 = vunpack.c.h.b16 %v472
  %v662 = vunpack.c.l.b16 %v473
  %v663 = vunpack.c.h.b16 %v473
  %v664 = vunpack.c.l.b16 %v474
  %v665 = vunpack.c.h.b16 %v474
  %v666 = vunpack.c.l.b16 %v475
  %v667 = vunpack.c.h.b16 %v475
  %v668 = vunpack.c.l.b16 %v476
  %v669 = vunpack.c.h.b16 %v476
  %v670 = vunpack.c.l.b16 %v477
  %v671 = vunpack.c.h.b16 %v477
  %v672 = vunpack.c.l.b16 %v478
  %v673 = vunpack.c.h.b16 %v478
  %v674 = vunpack.c.l.b16 %v479
  %v675 = vunpack.c.h.b16 %v479
  %v676 = vunpack.c.l.b16 %v480
  %v677 = vunpack.c.h.b16 %v480
  %v678 = vunpack.c.l.b16 %v481
  %v679 = vunpack.c.h.b16 %v481
  %v680 = vunpack.c.l.b16 %v482
  %v681 = vunpack.c.h.b16 %v482
  %v682 = vunpack.c.l.b16 %v483
  %v683 = vunpack.c.h.b16 %v483
  %v684 = vunpack.c.l.b16 %v484
  %v685 = vunpack.c.h.b16 %v484
  %v686 = vunpack.c.l.b16 %v485
  %v687 = vunpack.c.h.b16 %v485
  %v688 = vunpack.c.l.b16 %v486
  %v689 = vunpack.c.h.b16 %v486
  %v690 = vunpack.c.l.b16 %v487
  %v691 = vunpack.c.h.b16 %v487
  %v692 = vunpack.c.l.b16 %v488
  %v693 = vunpack.c.h.b16 %v488
  %v694 = vunpack.c.l.b16 %v489
  %v695 = vunpack.c.h.b16 %v489
  %v696 = vunpack.c.l.b16 %v490
  %v697 = vunpack.c.h.b16 %v490
  %v698 = vunpack.c.l.b16 %v491
  %v699 = vunpack.c.h.b16 %v491
  %v700 = vunpack.c.l.b16 %v492
  %v701 = vunpack.c.h.b16 %v492
  %v702 = vunpack.c.l.b16 %v493
  %v703 = vunpack.c.h.b16 %v493
  %v704 = vunpack.c.l.b16 %v494
  %v705 = vunpack.c.h.b16 %v494
  %v706 = vunpack.c.l.b16 %v495
  %v707 = vunpack.c.h.b16 %v495
  %v708 = vunpack.c.l.b16 %v496
  %v709 = vunpack.c.h.b16 %v496
  %v710 = vunpack.c.l.b16 %v497
  %v711 = vunpack.c.h.b16 %v497
  %v712 = vpack.c.b16 %v588, %v584
  %v713 = vpack.c.b16 %v589, %v585
  %v714 = vpack.c.b16 %v590, %v586
  %v715 = vpack.c.b16 %v591, %v587
  %v716 = vpack.c.b16 %v596, %v592
  %v717 = vpack.c.b16 %v597, %v593
  %v718 = vpack.c.b16 %v598, %v594
  %v719 = vpack.c.b16 %v599, %v595
  %v720 = vpack.c.b16 %v604, %v600
  %v721 = vpack.c.b16 %v605, %v601
  %v722 = vpack.c.b16 %v606, %v602
  %v723 = vpack.c.b16 %v607, %v603
  %v724 = vpack.c.b16 %v612, %v608
  %v725 = vpack.c.b16 %v613, %v609
  %v726 = vpack.c.b16 %v614, %v610
  %v727 = vpack.c.b16 %v615, %v611
  %v728 = vpack.c.b16 %v620, %v616
  %v729 = vpack.c.b16 %v621, %v617
  %v730 = vpack.c.b16 %v622, %v618
  %v731 = vpack.c.b16 %v623, %v619
  %v732 = vpack.c.b16 %v628, %v624
  %v733 = vpack.c.b16 %v629, %v625
  %v734 = vpack.c.b16 %v630, %v626
  %v735 = vpack.c.b16 %v631, %v627
  %v736 = vpack.c.b16 %v636, %v632
  %v737 = vpack.c.b16 %v637, %v633
  %v738 = vpack.c.b16 %v638, %v634
  %v739 = vpack.c.b16 %v639, %v635
  %v740 = vpack.c.b16 %v644, %v640
  %v741 = vpack.c.b16 %v645, %v641
  %v742 = vpack.c.b16 %v646, %v642
  %v743 = vpack.c.b16 %v647, %v643
  %v744 = vpack.c.b16 %v652, %v648
  %v745 = vpack.c.b16 %v653, %v649
  %v746 = vpack.c.b16 %v654, %v650
  %v747 = vpack.c.b16 %v655, %v651
  %v748 = vpack.c.b16 %v660, %v656
  %v749 = vpack.c.b16 %v661, %v657
  %v750 = vpack.c.b16 %v662, %v658
  %v751 = vpack.c.b16 %v663, %v659
  %v752 = vpack.c.b16 %v668, %v664
  %v753 = vpack.c.b16 %v669, %v665
  %v754 = vpack.c.b16 %v670, %v666
  %v755 = vpack.c.b16 %v671, %v667
  %v756 = vpack.c.b16 %v676, %v672
  %v757 = vpack.c.b16 %v677, %v673
  %v758 = vpack.c.b16 %v678, %v674
  %v759 = vpack.c.b16 %v679, %v675
  %v760 = vpack.c.b16 %v684, %v680
  %v761 = vpack.c.b16 %v685, %v681
  %v762 = vpack.c.b16 %v686, %v682
  %v763 = vpack.c.b16 %v687, %v683
  %v764 = vpack.c.b16 %v692, %v688
  %v765 = vpack.c.b16 %v693, %v689
  %v766 = vpack.c.b16 %v694, %v690
  %v767 = vpack.c.b16 %v695, %v691
  %v768 = vpack.c.b16 %v700, %v696
  %v769 = vpack.c.b16 %v701, %v697
  %v770 = vpack.c.b16 %v702, %v698
  %v771 = vpack.c.b16 %v703, %v699
  %v772 = vpack.c.b16 %v708, %v704
  %v773 = vpack.c.b16 %v709, %v705
  %v774 = vpack.c.b16 %v710, %v706
  %v775 = vpack.c.b16 %v711, %v707
  %840 = vmatprep.subr.bf16.mxu0 %v713
  %841 = vmatpush1.bf16.msra.mxu0 %v712
  %842 = vmatprep.subr.bf16.mxu0 %v717
  %843 = vmatpush1.bf16.msra.mxu0 %v716
  %844 = vmatprep.subr.bf16.mxu0 %v721
  %845 = vmatpush1.bf16.msra.mxu0 %v720
  %846 = vmatprep.subr.bf16.mxu0 %v725
  %847 = vmatpush1.bf16.msra.mxu0 %v724
  %848 = vmatprep.subr.bf16.mxu0 %v729
  %849 = vmatpush1.bf16.msra.mxu0 %v728
  %850 = vmatprep.subr.bf16.mxu0 %v733
  %851 = vmatpush1.bf16.msra.mxu0 %v732
  %852 = vmatprep.subr.bf16.mxu0 %v737
  %853 = vmatpush1.bf16.msra.mxu0 %v736
  %854 = vmatprep.subr.bf16.mxu0 %v741
  %855 = vmatpush1.bf16.msra.mxu0 %v740
  %856 = vmatprep.subr.bf16.mxu0 %v745
  %857 = vmatpush1.bf16.msra.mxu0 %v744
  %858 = vmatprep.subr.bf16.mxu0 %v749
  %859 = vmatpush1.bf16.msra.mxu0 %v748
  %860 = vmatprep.subr.bf16.mxu0 %v753
  %861 = vmatpush1.bf16.msra.mxu0 %v752
  %862 = vmatprep.subr.bf16.mxu0 %v757
  %863 = vmatpush1.bf16.msra.mxu0 %v756
  %864 = vmatprep.subr.bf16.mxu0 %v761
  %865 = vmatpush1.bf16.msra.mxu0 %v760
  %866 = vmatprep.subr.bf16.mxu0 %v765
  %867 = vmatpush1.bf16.msra.mxu0 %v764
  %868 = vmatprep.subr.bf16.mxu0 %v769
  %869 = vmatpush1.bf16.msra.mxu0 %v768
  %870 = vmatprep.subr.bf16.mxu0 %v773
  %871 = vmatpush1.bf16.msra.mxu0 %v772
  %872 = vmatprep.mubr.bf16.mxu0 %v433
  %873 = vmatmul.mubr.bf16.gmra.mrb[0].mxu0 %v432
  %v874 = vpop.f32.mrb[0].mxu0
  %v875 = vadd.f32 %v503, %v874
  %v876 = vpop.f32.mrb[0].mxu0
  %v877 = vadd.f32 %v507, %v876
  %v878 = vpop.f32.mrb[0].mxu0
  %v879 = vadd.f32 %v503, %v878
  %v880 = vpop.f32.mrb[0].mxu0
  %v881 = vadd.f32 %v507, %v880
  %882 = vdwg.mxu0
  %883 = vmatprep.subr.bf16.mxu0 %v715
  %884 = vmatpush1.bf16.msra.mxu0 %v714
  %885 = vmatprep.subr.bf16.mxu0 %v719
  %886 = vmatpush1.bf16.msra.mxu0 %v718
  %887 = vmatprep.subr.bf16.mxu0 %v723
  %888 = vmatpush1.bf16.msra.mxu0 %v722
  %889 = vmatprep.subr.bf16.mxu0 %v727
  %890 = vmatpush1.bf16.msra.mxu0 %v726
  %891 = vmatprep.subr.bf16.mxu0 %v731
  %892 = vmatpush1.bf16.msra.mxu0 %v730
  %893 = vmatprep.subr.bf16.mxu0 %v735
  %894 = vmatpush1.bf16.msra.mxu0 %v734
  %895 = vmatprep.subr.bf16.mxu0 %v739
  %896 = vmatpush1.bf16.msra.mxu0 %v738
  %897 = vmatprep.subr.bf16.mxu0 %v743
  %898 = vmatpush1.bf16.msra.mxu0 %v742
  %899 = vmatprep.subr.bf16.mxu0 %v747
  %900 = vmatpush1.bf16.msra.mxu0 %v746
  %901 = vmatprep.subr.bf16.mxu0 %v751
  %902 = vmatpush1.bf16.msra.mxu0 %v750
  %903 = vmatprep.subr.bf16.mxu0 %v755
  %904 = vmatpush1.bf16.msra.mxu0 %v754
  %905 = vmatprep.subr.bf16.mxu0 %v759
  %906 = vmatpush1.bf16.msra.mxu0 %v758
  %907 = vmatprep.subr.bf16.mxu0 %v763
  %908 = vmatpush1.bf16.msra.mxu0 %v762
  %909 = vmatprep.subr.bf16.mxu0 %v767
  %910 = vmatpush1.bf16.msra.mxu0 %v766
  %911 = vmatprep.subr.bf16.mxu0 %v771
  %912 = vmatpush1.bf16.msra.mxu0 %v770
  %913 = vmatprep.subr.bf16.mxu0 %v775
  %914 = vmatpush1.bf16.msra.mxu0 %v774
  %915 = vmatprep.mubr.bf16.mxu0 %v433
  %916 = vmatmul.mubr.bf16.gmra.mrb[0].mxu0 %v432
  %v917 = vpop.f32.mrb[0].mxu0
  %v918 = vadd.f32 %v511, %v917
  %v919 = vpop.f32.mrb[0].mxu0
  %v920 = vadd.f32 %v515, %v919
  %v921 = vpop.f32.mrb[0].mxu0
  %v922 = vadd.f32 %v511, %v921
  %v923 = vpop.f32.mrb[0].mxu0
  %v924 = vadd.f32 %v515, %v923
  %925 = vdwg.mxu0
  %v926 = vld [vmem:[%s9] sm:$0xf]
  %v927 = vld [vmem:[%s10] sm:$0xf]
  %v928 = vmul.f32 %v875, %v52
  %v929 = vmul.f32 %v877, %v52
  %v930 = vmul.f32 %v918, %v52
  %v931 = vmul.f32 %v920, %v52
  %v932 = vmul.f32 %v879, %v53
  %v933 = vmul.f32 %v881, %v53
  %v934 = vmul.f32 %v922, %v53
  %v935 = vmul.f32 %v924, %v53
  %v936 = vadd.f32 %v928, %v932
  %v937 = vrot.slane %v936, 4
  %v938 = vadd.f32 %v936, %v937
  %v939 = vrot.slane %v938, 2
  %v940 = vadd.f32 %v938, %v939
  %v941 = vrot.slane %v940, 1
  %v942 = vadd.f32 %v940, %v941
  %v943 = vadd.f32 %v929, %v933
  %v944 = vrot.slane %v943, 4
  %v945 = vadd.f32 %v943, %v944
  %v946 = vrot.slane %v945, 2
  %v947 = vadd.f32 %v945, %v946
  %v948 = vrot.slane %v947, 1
  %v949 = vadd.f32 %v947, %v948
  %v950 = vadd.f32 %v930, %v934
  %v951 = vrot.slane %v950, 4
  %v952 = vadd.f32 %v950, %v951
  %v953 = vrot.slane %v952, 2
  %v954 = vadd.f32 %v952, %v953
  %v955 = vrot.slane %v954, 1
  %v956 = vadd.f32 %v954, %v955
  %v957 = vadd.f32 %v931, %v935
  %v958 = vrot.slane %v957, 4
  %v959 = vadd.f32 %v957, %v958
  %v960 = vrot.slane %v959, 2
  %v961 = vadd.f32 %v959, %v960
  %v962 = vrot.slane %v961, 1
  %v963 = vadd.f32 %v961, %v962
  %v964 = vmul.f32 %v942, 0.125
  %v965 = vmul.f32 %v949, 0.125
  %v966 = vmul.f32 %v956, 0.125
  %v967 = vmul.f32 %v963, 0.125
  %v968 = vsub.f32 %v875, %v964
  %v969 = vsub.f32 %v877, %v965
  %v970 = vsub.f32 %v918, %v966
  %v971 = vsub.f32 %v920, %v967
  %v972 = vsub.f32 %v879, %v964
  %v973 = vsub.f32 %v881, %v965
  %v974 = vsub.f32 %v922, %v966
  %v975 = vsub.f32 %v924, %v967
  %v976 = vmul.f32 %v968, %v968
  %v977 = vmul.f32 %v969, %v969
  %v978 = vmul.f32 %v970, %v970
  %v979 = vmul.f32 %v971, %v971
  %v980 = vmul.f32 %v972, %v972
  %v981 = vmul.f32 %v973, %v973
  %v982 = vmul.f32 %v974, %v974
  %v983 = vmul.f32 %v975, %v975
  %v984 = vmul.f32 %v976, %v52
  %v985 = vmul.f32 %v977, %v52
  %v986 = vmul.f32 %v978, %v52
  %v987 = vmul.f32 %v979, %v52
  %v988 = vmul.f32 %v980, %v53
  %v989 = vmul.f32 %v981, %v53
  %v990 = vmul.f32 %v982, %v53
  %v991 = vmul.f32 %v983, %v53
  %v992 = vadd.f32 %v984, %v988
  %v993 = vrot.slane %v992, 4
  %v994 = vadd.f32 %v992, %v993
  %v995 = vrot.slane %v994, 2
  %v996 = vadd.f32 %v994, %v995
  %v997 = vrot.slane %v996, 1
  %v998 = vadd.f32 %v996, %v997
  %v999 = vadd.f32 %v985, %v989
  %v1000 = vrot.slane %v999, 4
  %v1001 = vadd.f32 %v999, %v1000
  %v1002 = vrot.slane %v1001, 2
  %v1003 = vadd.f32 %v1001, %v1002
  %v1004 = vrot.slane %v1003, 1
  %v1005 = vadd.f32 %v1003, %v1004
  %v1006 = vadd.f32 %v986, %v990
  %v1007 = vrot.slane %v1006, 4
  %v1008 = vadd.f32 %v1006, %v1007
  %v1009 = vrot.slane %v1008, 2
  %v1010 = vadd.f32 %v1008, %v1009
  %v1011 = vrot.slane %v1010, 1
  %v1012 = vadd.f32 %v1010, %v1011
  %v1013 = vadd.f32 %v987, %v991
  %v1014 = vrot.slane %v1013, 4
  %v1015 = vadd.f32 %v1013, %v1014
  %v1016 = vrot.slane %v1015, 2
  %v1017 = vadd.f32 %v1015, %v1016
  %v1018 = vrot.slane %v1017, 1
  %v1019 = vadd.f32 %v1017, %v1018
  %v1020 = vmul.f32 %v998, 0.125
  %v1021 = vmul.f32 %v1005, 0.125
  %v1022 = vmul.f32 %v1012, 0.125
  %v1023 = vmul.f32 %v1019, 0.125
  %v1024 = vadd.f32 %v1020, 1e-05
  %v1025 = vadd.f32 %v1021, 1e-05
  %v1026 = vadd.f32 %v1022, 1e-05
  %v1027 = vadd.f32 %v1023, 1e-05
  %v1028 = vrsqrt.pop %v1024
  %v1029 = vrsqrt.pop %v1025
  %v1030 = vrsqrt.pop %v1026
  %v1031 = vrsqrt.pop %v1027
  %v1032 = vmul.f32 %v968, %v1028
  %v1033 = vmul.f32 %v969, %v1029
  %v1034 = vmul.f32 %v970, %v1030
  %v1035 = vmul.f32 %v971, %v1031
  %v1036 = vmul.f32 %v972, %v1028
  %v1037 = vmul.f32 %v973, %v1029
  %v1038 = vmul.f32 %v974, %v1030
  %v1039 = vmul.f32 %v975, %v1031
  %v1041 = vlaneseq
  %v1042 = vshrl.u32 %v1041, 7
  %v1043 = vsub.s32 0, %v1042
  %v1044 = vrot.slane %v926, %v1043
  %v1045 = vlaneseq
  %v1046 = vshrl.u32 %v1045, 7
  %v1047 = vsub.s32 1, %v1046
  %v1048 = vrot.slane %v926, %v1047
  %v1049 = vlaneseq
  %v1050 = vshrl.u32 %v1049, 7
  %v1051 = vsub.s32 2, %v1050
  %v1052 = vrot.slane %v926, %v1051
  %v1053 = vlaneseq
  %v1054 = vshrl.u32 %v1053, 7
  %v1055 = vsub.s32 3, %v1054
  %v1056 = vrot.slane %v926, %v1055
  %v1061 = vmul.f32 %v1032, %v1044
  %v1062 = vmul.f32 %v1033, %v1048
  %v1063 = vmul.f32 %v1034, %v1052
  %v1064 = vmul.f32 %v1035, %v1056
  %v1065 = vmul.f32 %v1036, %v1044
  %v1066 = vmul.f32 %v1037, %v1048
  %v1067 = vmul.f32 %v1038, %v1052
  %v1068 = vmul.f32 %v1039, %v1056
  %v1070 = vlaneseq
  %v1071 = vshrl.u32 %v1070, 7
  %v1072 = vsub.s32 0, %v1071
  %v1073 = vrot.slane %v927, %v1072
  %v1074 = vlaneseq
  %v1075 = vshrl.u32 %v1074, 7
  %v1076 = vsub.s32 1, %v1075
  %v1077 = vrot.slane %v927, %v1076
  %v1078 = vlaneseq
  %v1079 = vshrl.u32 %v1078, 7
  %v1080 = vsub.s32 2, %v1079
  %v1081 = vrot.slane %v927, %v1080
  %v1082 = vlaneseq
  %v1083 = vshrl.u32 %v1082, 7
  %v1084 = vsub.s32 3, %v1083
  %v1085 = vrot.slane %v927, %v1084
  %v1090 = vadd.f32 %v1061, %v1073
  %v1091 = vadd.f32 %v1062, %v1077
  %v1092 = vadd.f32 %v1063, %v1081
  %v1093 = vadd.f32 %v1064, %v1085
  %v1094 = vadd.f32 %v1065, %v1073
  %v1095 = vadd.f32 %v1066, %v1077
  %v1096 = vadd.f32 %v1067, %v1081
  %v1097 = vadd.f32 %v1068, %v1085
  %vm1098 = vcmp.gt.f32.partialorder %v1090, 0.0
  %vm1099 = vcmp.gt.f32.partialorder %v1091, 0.0
  %vm1100 = vcmp.gt.f32.partialorder %v1092, 0.0
  %vm1101 = vcmp.gt.f32.partialorder %v1093, 0.0
  %vm1102 = vcmp.gt.f32.partialorder %v1094, 0.0
  %vm1103 = vcmp.gt.f32.partialorder %v1095, 0.0
  %vm1104 = vcmp.gt.f32.partialorder %v1096, 0.0
  %vm1105 = vcmp.gt.f32.partialorder %v1097, 0.0
  %v1106 = vmul.f32 %v1090, 0.2
  %v1107 = vmul.f32 %v1091, 0.2
  %v1108 = vmul.f32 %v1092, 0.2
  %v1109 = vmul.f32 %v1093, 0.2
  %v1110 = vmul.f32 %v1094, 0.2
  %v1111 = vmul.f32 %v1095, 0.2
  %v1112 = vmul.f32 %v1096, 0.2
  %v1113 = vmul.f32 %v1097, 0.2
  %v1114 = vsel %vm1098, %v1090, %v1106
  %v1115 = vsel %vm1099, %v1091, %v1107
  %v1116 = vsel %vm1100, %v1092, %v1108
  %v1117 = vsel %vm1101, %v1093, %v1109
  %v1118 = vsel %vm1102, %v1094, %v1110
  %v1119 = vsel %vm1103, %v1095, %v1111
  %v1120 = vsel %vm1104, %v1096, %v1112
  %v1121 = vsel %vm1105, %v1097, %v1113
  %v1122 = vpack.c.bf16 %v1118, %v1114
  %v1123 = vpack.c.bf16 %v1119, %v1115
  %v1124 = vpack.c.bf16 %v1120, %v1116
  %v1125 = vpack.c.bf16 %v1121, %v1117
  %v1126 = vld [vmem:[%s11] sm:$0xff]
  %v1127 = vld [vmem:[%s11 + $0x8] sm:$0xff]
  %v1128 = vld [vmem:[%s11 + $0x10] sm:$0xff]
  %v1129 = vld [vmem:[%s11 + $0x18] sm:$0xf]
  %v1130 = vld [vmem:[%s11 + $0x1c] sm:$0xff]
  %v1131 = vld [vmem:[%s11 + $0x24] sm:$0xff]
  %v1132 = vld [vmem:[%s11 + $0x2c] sm:$0xff]
  %v1133 = vld [vmem:[%s11 + $0x34] sm:$0xf]
  %v1134 = vld [vmem:[%s11 + $0x38] sm:$0xff]
  %v1135 = vld [vmem:[%s11 + $0x40] sm:$0xff]
  %v1136 = vld [vmem:[%s11 + $0x48] sm:$0xff]
  %v1137 = vld [vmem:[%s11 + $0x50] sm:$0xf]
  %v1138 = vld [vmem:[%s11 + $0x54] sm:$0xff]
  %v1139 = vld [vmem:[%s11 + $0x5c] sm:$0xff]
  %v1140 = vld [vmem:[%s11 + $0x64] sm:$0xff]
  %v1141 = vld [vmem:[%s11 + $0x6c] sm:$0xf]
  %v1142 = vld [vmem:[%s11 + $0x70] sm:$0xff]
  %v1143 = vld [vmem:[%s11 + $0x78] sm:$0xff]
  %v1144 = vld [vmem:[%s11 + $0x80] sm:$0xff]
  %v1145 = vld [vmem:[%s11 + $0x88] sm:$0xf]
  %v1146 = vld [vmem:[%s11 + $0x8c] sm:$0xff]
  %v1147 = vld [vmem:[%s11 + $0x94] sm:$0xff]
  %v1148 = vld [vmem:[%s11 + $0x9c] sm:$0xff]
  %v1149 = vld [vmem:[%s11 + $0xa4] sm:$0xf]
  %v1150 = vld [vmem:[%s11 + $0xa8] sm:$0xff]
  %v1151 = vld [vmem:[%s11 + $0xb0] sm:$0xff]
  %v1152 = vld [vmem:[%s11 + $0xb8] sm:$0xff]
  %v1153 = vld [vmem:[%s11 + $0xc0] sm:$0xf]
  %v1154 = vld [vmem:[%s11 + $0xc4] sm:$0xff]
  %v1155 = vld [vmem:[%s11 + $0xcc] sm:$0xff]
  %v1156 = vld [vmem:[%s11 + $0xd4] sm:$0xff]
  %v1157 = vld [vmem:[%s11 + $0xdc] sm:$0xf]
  %v1158 = vld [vmem:[%s11 + $0xe0] sm:$0xff]
  %v1159 = vld [vmem:[%s11 + $0xe8] sm:$0xff]
  %v1160 = vld [vmem:[%s11 + $0xf0] sm:$0xff]
  %v1161 = vld [vmem:[%s11 + $0xf8] sm:$0xf]
  %v1162 = vld [vmem:[%s11 + $0xfc] sm:$0xff]
  %v1163 = vld [vmem:[%s11 + $0x104] sm:$0xff]
  %v1164 = vld [vmem:[%s11 + $0x10c] sm:$0xff]
  %v1165 = vld [vmem:[%s11 + $0x114] sm:$0xf]
  %v1166 = vld [vmem:[%s11 + $0x118] sm:$0xff]
  %v1167 = vld [vmem:[%s11 + $0x120] sm:$0xff]
  %v1168 = vld [vmem:[%s11 + $0x128] sm:$0xff]
  %v1169 = vld [vmem:[%s11 + $0x130] sm:$0xf]
  %v1170 = vld [vmem:[%s11 + $0x134] sm:$0xff]
  %v1171 = vld [vmem:[%s11 + $0x13c] sm:$0xff]
  %v1172 = vld [vmem:[%s11 + $0x144] sm:$0xff]
  %v1173 = vld [vmem:[%s11 + $0x14c] sm:$0xf]
  %v1174 = vld [vmem:[%s11 + $0x150] sm:$0xff]
  %v1175 = vld [vmem:[%s11 + $0x158] sm:$0xff]
  %v1176 = vld [vmem:[%s11 + $0x160] sm:$0xff]
  %v1177 = vld [vmem:[%s11 + $0x168] sm:$0xf]
  %v1178 = vld [vmem:[%s11 + $0x16c] sm:$0xff]
  %v1179 = vld [vmem:[%s11 + $0x174] sm:$0xff]
  %v1180 = vld [vmem:[%s11 + $0x17c] sm:$0xff]
  %v1181 = vld [vmem:[%s11 + $0x184] sm:$0xf]
  %v1182 = vld [vmem:[%s11 + $0x188] sm:$0xff]
  %v1183 = vld [vmem:[%s11 + $0x190] sm:$0xff]
  %v1184 = vld [vmem:[%s11 + $0x198] sm:$0xff]
  %v1185 = vld [vmem:[%s11 + $0x1a0] sm:$0xf]
  %v1186 = vld [vmem:[%s11 + $0x1a4] sm:$0xff]
  %v1187 = vld [vmem:[%s11 + $0x1ac] sm:$0xff]
  %v1188 = vld [vmem:[%s11 + $0x1b4] sm:$0xff]
  %v1189 = vld [vmem:[%s11 + $0x1bc] sm:$0xf]
  %v1190 = vld [vmem:[%s11 + $0x1c0] sm:$0xff]
  %v1191 = vld [vmem:[%s11 + $0x1c8] sm:$0xff]
  %v1192 = vld [vmem:[%s11 + $0x1d0] sm:$0xff]
  %v1193 = vld [vmem:[%s11 + $0x1d8] sm:$0xf]
  %v1194 = vld [vmem:[%s11 + $0x1dc] sm:$0xff]
  %v1195 = vld [vmem:[%s11 + $0x1e4] sm:$0xff]
  %v1196 = vld [vmem:[%s11 + $0x1ec] sm:$0xff]
  %v1197 = vld [vmem:[%s11 + $0x1f4] sm:$0xf]
  %v1198 = vld [vmem:[%s11 + $0x1f8] sm:$0xff]
  %v1199 = vld [vmem:[%s11 + $0x200] sm:$0xff]
  %v1200 = vld [vmem:[%s11 + $0x208] sm:$0xff]
  %v1201 = vld [vmem:[%s11 + $0x210] sm:$0xf]
  %v1202 = vld [vmem:[%s11 + $0x214] sm:$0xff]
  %v1203 = vld [vmem:[%s11 + $0x21c] sm:$0xff]
  %v1204 = vld [vmem:[%s11 + $0x224] sm:$0xff]
  %v1205 = vld [vmem:[%s11 + $0x22c] sm:$0xf]
  %v1206 = vld [vmem:[%s11 + $0x230] sm:$0xff]
  %v1207 = vld [vmem:[%s11 + $0x238] sm:$0xff]
  %v1208 = vld [vmem:[%s11 + $0x240] sm:$0xff]
  %v1209 = vld [vmem:[%s11 + $0x248] sm:$0xf]
  %v1210 = vld [vmem:[%s11 + $0x24c] sm:$0xff]
  %v1211 = vld [vmem:[%s11 + $0x254] sm:$0xff]
  %v1212 = vld [vmem:[%s11 + $0x25c] sm:$0xff]
  %v1213 = vld [vmem:[%s11 + $0x264] sm:$0xf]
  %v1214 = vld [vmem:[%s11 + $0x268] sm:$0xff]
  %v1215 = vld [vmem:[%s11 + $0x270] sm:$0xff]
  %v1216 = vld [vmem:[%s11 + $0x278] sm:$0xff]
  %v1217 = vld [vmem:[%s11 + $0x280] sm:$0xf]
  %v1218 = vld [vmem:[%s11 + $0x284] sm:$0xff]
  %v1219 = vld [vmem:[%s11 + $0x28c] sm:$0xff]
  %v1220 = vld [vmem:[%s11 + $0x294] sm:$0xff]
  %v1221 = vld [vmem:[%s11 + $0x29c] sm:$0xf]
  %v1222 = vld [vmem:[%s11 + $0x2a0] sm:$0xff]
  %v1223 = vld [vmem:[%s11 + $0x2a8] sm:$0xff]
  %v1224 = vld [vmem:[%s11 + $0x2b0] sm:$0xff]
  %v1225 = vld [vmem:[%s11 + $0x2b8] sm:$0xf]
  %v1226 = vld [vmem:[%s11 + $0x2bc] sm:$0xff]
  %v1227 = vld [vmem:[%s11 + $0x2c4] sm:$0xff]
  %v1228 = vld [vmem:[%s11 + $0x2cc] sm:$0xff]
  %v1229 = vld [vmem:[%s11 + $0x2d4] sm:$0xf]
  %v1230 = vld [vmem:[%s11 + $0x2d8] sm:$0xff]
  %v1231 = vld [vmem:[%s11 + $0x2e0] sm:$0xff]
  %v1232 = vld [vmem:[%s11 + $0x2e8] sm:$0xff]
  %v1233 = vld [vmem:[%s11 + $0x2f0] sm:$0xf]
  %v1234 = vld [vmem:[%s11 + $0x2f4] sm:$0xff]
  %v1235 = vld [vmem:[%s11 + $0x2fc] sm:$0xff]
  %v1236 = vld [vmem:[%s11 + $0x304] sm:$0xff]
  %v1237 = vld [vmem:[%s11 + $0x30c] sm:$0xf]
  %v1238 = vld [vmem:[%s11 + $0x310] sm:$0xff]
  %v1239 = vld [vmem:[%s11 + $0x318] sm:$0xff]
  %v1240 = vld [vmem:[%s11 + $0x320] sm:$0xff]
  %v1241 = vld [vmem:[%s11 + $0x328] sm:$0xf]
  %v1242 = vld [vmem:[%s11 + $0x32c] sm:$0xff]
  %v1243 = vld [vmem:[%s11 + $0x334] sm:$0xff]
  %v1244 = vld [vmem:[%s11 + $0x33c] sm:$0xff]
  %v1245 = vld [vmem:[%s11 + $0x344] sm:$0xf]
  %v1246 = vld [vmem:[%s11 + $0x348] sm:$0xff]
  %v1247 = vld [vmem:[%s11 + $0x350] sm:$0xff]
  %v1248 = vld [vmem:[%s11 + $0x358] sm:$0xff]
  %v1249 = vld [vmem:[%s11 + $0x360] sm:$0xf]
  %v1250 = vld [vmem:[%s11 + $0x364] sm:$0xff]
  %v1251 = vld [vmem:[%s11 + $0x36c] sm:$0xff]
  %v1252 = vld [vmem:[%s11 + $0x374] sm:$0xff]
  %v1253 = vld [vmem:[%s11 + $0x37c] sm:$0xf]
  %v1254 = vld [vmem:[%s11 + $0x380] sm:$0xff]
  %v1255 = vld [vmem:[%s11 + $0x388] sm:$0xff]
  %v1256 = vld [vmem:[%s11 + $0x390] sm:$0xff]
  %v1257 = vld [vmem:[%s11 + $0x398] sm:$0xf]
  %v1258 = vld [vmem:[%s11 + $0x39c] sm:$0xff]
  %v1259 = vld [vmem:[%s11 + $0x3a4] sm:$0xff]
  %v1260 = vld [vmem:[%s11 + $0x3ac] sm:$0xff]
  %v1261 = vld [vmem:[%s11 + $0x3b4] sm:$0xf]
  %v1262 = vld [vmem:[%s11 + $0x3b8] sm:$0xff]
  %v1263 = vld [vmem:[%s11 + $0x3c0] sm:$0xff]
  %v1264 = vld [vmem:[%s11 + $0x3c8] sm:$0xff]
  %v1265 = vld [vmem:[%s11 + $0x3d0] sm:$0xf]
  %v1266 = vld [vmem:[%s11 + $0x3d4] sm:$0xff]
  %v1267 = vld [vmem:[%s11 + $0x3dc] sm:$0xff]
  %v1268 = vld [vmem:[%s11 + $0x3e4] sm:$0xff]
  %v1269 = vld [vmem:[%s11 + $0x3ec] sm:$0xf]
  %v1270 = vld [vmem:[%s11 + $0x3f0] sm:$0xff]
  %v1271 = vld [vmem:[%s11 + $0x3f8] sm:$0xff]
  %v1272 = vld [vmem:[%s11 + $0x400] sm:$0xff]
  %v1273 = vld [vmem:[%s11 + $0x408] sm:$0xf]
  %v1274 = vld [vmem:[%s11 + $0x40c] sm:$0xff]
  %v1275 = vld [vmem:[%s11 + $0x414] sm:$0xff]
  %v1276 = vld [vmem:[%s11 + $0x41c] sm:$0xff]
  %v1277 = vld [vmem:[%s11 + $0x424] sm:$0xf]
  %v1278 = vld [vmem:[%s11 + $0x428] sm:$0xff]
  %v1279 = vld [vmem:[%s11 + $0x430] sm:$0xff]
  %v1280 = vld [vmem:[%s11 + $0x438] sm:$0xff]
  %v1281 = vld [vmem:[%s11 + $0x440] sm:$0xf]
  %v1282 = vld [vmem:[%s11 + $0x444] sm:$0xff]
  %v1283 = vld [vmem:[%s11 + $0x44c] sm:$0xff]
  %v1284 = vld [vmem:[%s11 + $0x454] sm:$0xff]
  %v1285 = vld [vmem:[%s11 + $0x45c] sm:$0xf]
  %v1286 = vld [vmem:[%s11 + $0x460] sm:$0xff]
  %v1287 = vld [vmem:[%s11 + $0x468] sm:$0xff]
  %v1288 = vld [vmem:[%s11 + $0x470] sm:$0xff]
  %v1289 = vld [vmem:[%s11 + $0x478] sm:$0xf]
  %v1290 = vld [vmem:[%s11 + $0x47c] sm:$0xff]
  %v1291 = vld [vmem:[%s11 + $0x484] sm:$0xff]
  %v1292 = vld [vmem:[%s11 + $0x48c] sm:$0xff]
  %v1293 = vld [vmem:[%s11 + $0x494] sm:$0xf]
  %v1294 = vld [vmem:[%s11 + $0x498] sm:$0xff]
  %v1295 = vld [vmem:[%s11 + $0x4a0] sm:$0xff]
  %v1296 = vld [vmem:[%s11 + $0x4a8] sm:$0xff]
  %v1297 = vld [vmem:[%s11 + $0x4b0] sm:$0xf]
  %v1298 = vld [vmem:[%s11 + $0x4b4] sm:$0xff]
  %v1299 = vld [vmem:[%s11 + $0x4bc] sm:$0xff]
  %v1300 = vld [vmem:[%s11 + $0x4c4] sm:$0xff]
  %v1301 = vld [vmem:[%s11 + $0x4cc] sm:$0xf]
  %v1302 = vld [vmem:[%s11 + $0x4d0] sm:$0xff]
  %v1303 = vld [vmem:[%s11 + $0x4d8] sm:$0xff]
  %v1304 = vld [vmem:[%s11 + $0x4e0] sm:$0xff]
  %v1305 = vld [vmem:[%s11 + $0x4e8] sm:$0xf]
  %v1306 = vld [vmem:[%s11 + $0x4ec] sm:$0xff]
  %v1307 = vld [vmem:[%s11 + $0x4f4] sm:$0xff]
  %v1308 = vld [vmem:[%s11 + $0x4fc] sm:$0xff]
  %v1309 = vld [vmem:[%s11 + $0x504] sm:$0xf]
  %v1310 = vld [vmem:[%s11 + $0x508] sm:$0xff]
  %v1311 = vld [vmem:[%s11 + $0x510] sm:$0xff]
  %v1312 = vld [vmem:[%s11 + $0x518] sm:$0xff]
  %v1313 = vld [vmem:[%s11 + $0x520] sm:$0xf]
  %v1314 = vld [vmem:[%s11 + $0x524] sm:$0xff]
  %v1315 = vld [vmem:[%s11 + $0x52c] sm:$0xff]
  %v1316 = vld [vmem:[%s11 + $0x534] sm:$0xff]
  %v1317 = vld [vmem:[%s11 + $0x53c] sm:$0xf]
  %v1318 = vld [vmem:[%s11 + $0x540] sm:$0xff]
  %v1319 = vld [vmem:[%s11 + $0x548] sm:$0xff]
  %v1320 = vld [vmem:[%s11 + $0x550] sm:$0xff]
  %v1321 = vld [vmem:[%s11 + $0x558] sm:$0xf]
  %v1322 = vld [vmem:[%s11 + $0x55c] sm:$0xff]
  %v1323 = vld [vmem:[%s11 + $0x564] sm:$0xff]
  %v1324 = vld [vmem:[%s11 + $0x56c] sm:$0xff]
  %v1325 = vld [vmem:[%s11 + $0x574] sm:$0xf]
  %v1326 = vld [vmem:[%s11 + $0x578] sm:$0xff]
  %v1327 = vld [vmem:[%s11 + $0x580] sm:$0xff]
  %v1328 = vld [vmem:[%s11 + $0x588] sm:$0xff]
  %v1329 = vld [vmem:[%s11 + $0x590] sm:$0xf]
  %v1330 = vld [vmem:[%s11 + $0x594] sm:$0xff]
  %v1331 = vld [vmem:[%s11 + $0x59c] sm:$0xff]
  %v1332 = vld [vmem:[%s11 + $0x5a4] sm:$0xff]
  %v1333 = vld [vmem:[%s11 + $0x5ac] sm:$0xf]
  %v1334 = vld [vmem:[%s11 + $0x5b0] sm:$0xff]
  %v1335 = vld [vmem:[%s11 + $0x5b8] sm:$0xff]
  %v1336 = vld [vmem:[%s11 + $0x5c0] sm:$0xff]
  %v1337 = vld [vmem:[%s11 + $0x5c8] sm:$0xf]
  %v1338 = vld [vmem:[%s11 + $0x5cc] sm:$0xff]
  %v1339 = vld [vmem:[%s11 + $0x5d4] sm:$0xff]
  %v1340 = vld [vmem:[%s11 + $0x5dc] sm:$0xff]
  %v1341 = vld [vmem:[%s11 + $0x5e4] sm:$0xf]
  %v1342 = vld [vmem:[%s11 + $0x5e8] sm:$0xff]
  %v1343 = vld [vmem:[%s11 + $0x5f0] sm:$0xff]
  %v1344 = vld [vmem:[%s11 + $0x5f8] sm:$0xff]
  %v1345 = vld [vmem:[%s11 + $0x600] sm:$0xf]
  %v1346 = vld [vmem:[%s11 + $0x604] sm:$0xff]
  %v1347 = vld [vmem:[%s11 + $0x60c] sm:$0xff]
  %v1348 = vld [vmem:[%s11 + $0x614] sm:$0xff]
  %v1349 = vld [vmem:[%s11 + $0x61c] sm:$0xf]
  %v1350 = vld [vmem:[%s11 + $0x620] sm:$0xff]
  %v1351 = vld [vmem:[%s11 + $0x628] sm:$0xff]
  %v1352 = vld [vmem:[%s11 + $0x630] sm:$0xff]
  %v1353 = vld [vmem:[%s11 + $0x638] sm:$0xf]
  %v1354 = vld [vmem:[%s11 + $0x63c] sm:$0xff]
  %v1355 = vld [vmem:[%s11 + $0x644] sm:$0xff]
  %v1356 = vld [vmem:[%s11 + $0x64c] sm:$0xff]
  %v1357 = vld [vmem:[%s11 + $0x654] sm:$0xf]
  %v1358 = vld [vmem:[%s11 + $0x658] sm:$0xff]
  %v1359 = vld [vmem:[%s11 + $0x660] sm:$0xff]
  %v1360 = vld [vmem:[%s11 + $0x668] sm:$0xff]
  %v1361 = vld [vmem:[%s11 + $0x670] sm:$0xf]
  %v1362 = vld [vmem:[%s11 + $0x674] sm:$0xff]
  %v1363 = vld [vmem:[%s11 + $0x67c] sm:$0xff]
  %v1364 = vld [vmem:[%s11 + $0x684] sm:$0xff]
  %v1365 = vld [vmem:[%s11 + $0x68c] sm:$0xf]
  %v1366 = vld [vmem:[%s11 + $0x690] sm:$0xff]
  %v1367 = vld [vmem:[%s11 + $0x698] sm:$0xff]
  %v1368 = vld [vmem:[%s11 + $0x6a0] sm:$0xff]
  %v1369 = vld [vmem:[%s11 + $0x6a8] sm:$0xf]
  %v1370 = vld [vmem:[%s11 + $0x6ac] sm:$0xff]
  %v1371 = vld [vmem:[%s11 + $0x6b4] sm:$0xff]
  %v1372 = vld [vmem:[%s11 + $0x6bc] sm:$0xff]
  %v1373 = vld [vmem:[%s11 + $0x6c4] sm:$0xf]
  %v1374 = vld [vmem:[%s11 + $0x6c8] sm:$0xff]
  %v1375 = vld [vmem:[%s11 + $0x6d0] sm:$0xff]
  %v1376 = vld [vmem:[%s11 + $0x6d8] sm:$0xff]
  %v1377 = vld [vmem:[%s11 + $0x6e0] sm:$0xf]
  %v1378 = vld [vmem:[%s11 + $0x6e4] sm:$0xff]
  %v1379 = vld [vmem:[%s11 + $0x6ec] sm:$0xff]
  %v1380 = vld [vmem:[%s11 + $0x6f4] sm:$0xff]
  %v1381 = vld [vmem:[%s11 + $0x6fc] sm:$0xf]
  %v1382 = vld [vmem:[%s12] sm:$0xff]
  %v1384 = vlaneseq
  %v1385 = vshrl.u32 %v1384, 7
  %v1386 = vsub.s32 0, %v1385
  %v1387 = vrot.slane %v1382, %v1386
  %v1388 = vlaneseq
  %v1389 = vshrl.u32 %v1388, 7
  %v1390 = vsub.s32 1, %v1389
  %v1391 = vrot.slane %v1382, %v1390
  %v1392 = vlaneseq
  %v1393 = vshrl.u32 %v1392, 7
  %v1394 = vsub.s32 2, %v1393
  %v1395 = vrot.slane %v1382, %v1394
  %v1396 = vlaneseq
  %v1397 = vshrl.u32 %v1396, 7
  %v1398 = vsub.s32 3, %v1397
  %v1399 = vrot.slane %v1382, %v1398
  %v1400 = vlaneseq
  %v1401 = vshrl.u32 %v1400, 7
  %v1402 = vsub.s32 4, %v1401
  %v1403 = vrot.slane %v1382, %v1402
  %v1404 = vlaneseq
  %v1405 = vshrl.u32 %v1404, 7
  %v1406 = vsub.s32 5, %v1405
  %v1407 = vrot.slane %v1382, %v1406
  %v1408 = vlaneseq
  %v1409 = vshrl.u32 %v1408, 7
  %v1410 = vsub.s32 6, %v1409
  %v1411 = vrot.slane %v1382, %v1410
  %v1675 = vunpack.c.l.b16 %v1126
  %v1676 = vunpack.c.h.b16 %v1126
  %v1677 = vunpack.c.l.b16 %v1127
  %v1678 = vunpack.c.h.b16 %v1127
  %v1679 = vunpack.c.l.b16 %v1128
  %v1680 = vunpack.c.h.b16 %v1128
  %v1681 = vunpack.c.l.b16 %v1129
  %v1682 = vunpack.c.l.b16 %v1130
  %v1683 = vunpack.c.h.b16 %v1130
  %v1684 = vunpack.c.l.b16 %v1131
  %v1685 = vunpack.c.h.b16 %v1131
  %v1686 = vunpack.c.l.b16 %v1132
  %v1687 = vunpack.c.h.b16 %v1132
  %v1688 = vunpack.c.l.b16 %v1133
  %v1689 = vunpack.c.l.b16 %v1134
  %v1690 = vunpack.c.h.b16 %v1134
  %v1691 = vunpack.c.l.b16 %v1135
  %v1692 = vunpack.c.h.b16 %v1135
  %v1693 = vunpack.c.l.b16 %v1136
  %v1694 = vunpack.c.h.b16 %v1136
  %v1695 = vunpack.c.l.b16 %v1137
  %v1696 = vunpack.c.l.b16 %v1138
  %v1697 = vunpack.c.h.b16 %v1138
  %v1698 = vunpack.c.l.b16 %v1139
  %v1699 = vunpack.c.h.b16 %v1139
  %v1700 = vunpack.c.l.b16 %v1140
  %v1701 = vunpack.c.h.b16 %v1140
  %v1702 = vunpack.c.l.b16 %v1141
  %v1703 = vunpack.c.l.b16 %v1142
  %v1704 = vunpack.c.h.b16 %v1142
  %v1705 = vunpack.c.l.b16 %v1143
  %v1706 = vunpack.c.h.b16 %v1143
  %v1707 = vunpack.c.l.b16 %v1144
  %v1708 = vunpack.c.h.b16 %v1144
  %v1709 = vunpack.c.l.b16 %v1145
  %v1710 = vunpack.c.l.b16 %v1146
  %v1711 = vunpack.c.h.b16 %v1146
  %v1712 = vunpack.c.l.b16 %v1147
  %v1713 = vunpack.c.h.b16 %v1147
  %v1714 = vunpack.c.l.b16 %v1148
  %v1715 = vunpack.c.h.b16 %v1148
  %v1716 = vunpack.c.l.b16 %v1149
  %v1717 = vunpack.c.l.b16 %v1150
  %v1718 = vunpack.c.h.b16 %v1150
  %v1719 = vunpack.c.l.b16 %v1151
  %v1720 = vunpack.c.h.b16 %v1151
  %v1721 = vunpack.c.l.b16 %v1152
  %v1722 = vunpack.c.h.b16 %v1152
  %v1723 = vunpack.c.l.b16 %v1153
  %v1724 = vunpack.c.l.b16 %v1154
  %v1725 = vunpack.c.h.b16 %v1154
  %v1726 = vunpack.c.l.b16 %v1155
  %v1727 = vunpack.c.h.b16 %v1155
  %v1728 = vunpack.c.l.b16 %v1156
  %v1729 = vunpack.c.h.b16 %v1156
  %v1730 = vunpack.c.l.b16 %v1157
  %v1731 = vunpack.c.l.b16 %v1158
  %v1732 = vunpack.c.h.b16 %v1158
  %v1733 = vunpack.c.l.b16 %v1159
  %v1734 = vunpack.c.h.b16 %v1159
  %v1735 = vunpack.c.l.b16 %v1160
  %v1736 = vunpack.c.h.b16 %v1160
  %v1737 = vunpack.c.l.b16 %v1161
  %v1738 = vunpack.c.l.b16 %v1162
  %v1739 = vunpack.c.h.b16 %v1162
  %v1740 = vunpack.c.l.b16 %v1163
  %v1741 = vunpack.c.h.b16 %v1163
  %v1742 = vunpack.c.l.b16 %v1164
  %v1743 = vunpack.c.h.b16 %v1164
  %v1744 = vunpack.c.l.b16 %v1165
  %v1745 = vunpack.c.l.b16 %v1166
  %v1746 = vunpack.c.h.b16 %v1166
  %v1747 = vunpack.c.l.b16 %v1167
  %v1748 = vunpack.c.h.b16 %v1167
  %v1749 = vunpack.c.l.b16 %v1168
  %v1750 = vunpack.c.h.b16 %v1168
  %v1751 = vunpack.c.l.b16 %v1169
  %v1752 = vunpack.c.l.b16 %v1170
  %v1753 = vunpack.c.h.b16 %v1170
  %v1754 = vunpack.c.l.b16 %v1171
  %v1755 = vunpack.c.h.b16 %v1171
  %v1756 = vunpack.c.l.b16 %v1172
  %v1757 = vunpack.c.h.b16 %v1172
  %v1758 = vunpack.c.l.b16 %v1173
  %v1759 = vunpack.c.l.b16 %v1174
  %v1760 = vunpack.c.h.b16 %v1174
  %v1761 = vunpack.c.l.b16 %v1175
  %v1762 = vunpack.c.h.b16 %v1175
  %v1763 = vunpack.c.l.b16 %v1176
  %v1764 = vunpack.c.h.b16 %v1176
  %v1765 = vunpack.c.l.b16 %v1177
  %v1766 = vunpack.c.l.b16 %v1178
  %v1767 = vunpack.c.h.b16 %v1178
  %v1768 = vunpack.c.l.b16 %v1179
  %v1769 = vunpack.c.h.b16 %v1179
  %v1770 = vunpack.c.l.b16 %v1180
  %v1771 = vunpack.c.h.b16 %v1180
  %v1772 = vunpack.c.l.b16 %v1181
  %v1773 = vunpack.c.l.b16 %v1182
  %v1774 = vunpack.c.h.b16 %v1182
  %v1775 = vunpack.c.l.b16 %v1183
  %v1776 = vunpack.c.h.b16 %v1183
  %v1777 = vunpack.c.l.b16 %v1184
  %v1778 = vunpack.c.h.b16 %v1184
  %v1779 = vunpack.c.l.b16 %v1185
  %v1780 = vunpack.c.l.b16 %v1186
  %v1781 = vunpack.c.h.b16 %v1186
  %v1782 = vunpack.c.l.b16 %v1187
  %v1783 = vunpack.c.h.b16 %v1187
  %v1784 = vunpack.c.l.b16 %v1188
  %v1785 = vunpack.c.h.b16 %v1188
  %v1786 = vunpack.c.l.b16 %v1189
  %v1787 = vunpack.c.l.b16 %v1190
  %v1788 = vunpack.c.h.b16 %v1190
  %v1789 = vunpack.c.l.b16 %v1191
  %v1790 = vunpack.c.h.b16 %v1191
  %v1791 = vunpack.c.l.b16 %v1192
  %v1792 = vunpack.c.h.b16 %v1192
  %v1793 = vunpack.c.l.b16 %v1193
  %v1794 = vunpack.c.l.b16 %v1194
  %v1795 = vunpack.c.h.b16 %v1194
  %v1796 = vunpack.c.l.b16 %v1195
  %v1797 = vunpack.c.h.b16 %v1195
  %v1798 = vunpack.c.l.b16 %v1196
  %v1799 = vunpack.c.h.b16 %v1196
  %v1800 = vunpack.c.l.b16 %v1197
  %v1801 = vunpack.c.l.b16 %v1198
  %v1802 = vunpack.c.h.b16 %v1198
  %v1803 = vunpack.c.l.b16 %v1199
  %v1804 = vunpack.c.h.b16 %v1199
  %v1805 = vunpack.c.l.b16 %v1200
  %v1806 = vunpack.c.h.b16 %v1200
  %v1807 = vunpack.c.l.b16 %v1201
  %v1808 = vunpack.c.l.b16 %v1202
  %v1809 = vunpack.c.h.b16 %v1202
  %v1810 = vunpack.c.l.b16 %v1203
  %v1811 = vunpack.c.h.b16 %v1203
  %v1812 = vunpack.c.l.b16 %v1204
  %v1813 = vunpack.c.h.b16 %v1204
  %v1814 = vunpack.c.l.b16 %v1205
  %v1815 = vunpack.c.l.b16 %v1206
  %v1816 = vunpack.c.h.b16 %v1206
  %v1817 = vunpack.c.l.b16 %v1207
  %v1818 = vunpack.c.h.b16 %v1207
  %v1819 = vunpack.c.l.b16 %v1208
  %v1820 = vunpack.c.h.b16 %v1208
  %v1821 = vunpack.c.l.b16 %v1209
  %v1822 = vunpack.c.l.b16 %v1210
  %v1823 = vunpack.c.h.b16 %v1210
  %v1824 = vunpack.c.l.b16 %v1211
  %v1825 = vunpack.c.h.b16 %v1211
  %v1826 = vunpack.c.l.b16 %v1212
  %v1827 = vunpack.c.h.b16 %v1212
  %v1828 = vunpack.c.l.b16 %v1213
  %v1829 = vunpack.c.l.b16 %v1214
  %v1830 = vunpack.c.h.b16 %v1214
  %v1831 = vunpack.c.l.b16 %v1215
  %v1832 = vunpack.c.h.b16 %v1215
  %v1833 = vunpack.c.l.b16 %v1216
  %v1834 = vunpack.c.h.b16 %v1216
  %v1835 = vunpack.c.l.b16 %v1217
  %v1836 = vunpack.c.l.b16 %v1218
  %v1837 = vunpack.c.h.b16 %v1218
  %v1838 = vunpack.c.l.b16 %v1219
  %v1839 = vunpack.c.h.b16 %v1219
  %v1840 = vunpack.c.l.b16 %v1220
  %v1841 = vunpack.c.h.b16 %v1220
  %v1842 = vunpack.c.l.b16 %v1221
  %v1843 = vunpack.c.l.b16 %v1222
  %v1844 = vunpack.c.h.b16 %v1222
  %v1845 = vunpack.c.l.b16 %v1223
  %v1846 = vunpack.c.h.b16 %v1223
  %v1847 = vunpack.c.l.b16 %v1224
  %v1848 = vunpack.c.h.b16 %v1224
  %v1849 = vunpack.c.l.b16 %v1225
  %v1850 = vunpack.c.l.b16 %v1226
  %v1851 = vunpack.c.h.b16 %v1226
  %v1852 = vunpack.c.l.b16 %v1227
  %v1853 = vunpack.c.h.b16 %v1227
  %v1854 = vunpack.c.l.b16 %v1228
  %v1855 = vunpack.c.h.b16 %v1228
  %v1856 = vunpack.c.l.b16 %v1229
  %v1857 = vunpack.c.l.b16 %v1230
  %v1858 = vunpack.c.h.b16 %v1230
  %v1859 = vunpack.c.l.b16 %v1231
  %v1860 = vunpack.c.h.b16 %v1231
  %v1861 = vunpack.c.l.b16 %v1232
  %v1862 = vunpack.c.h.b16 %v1232
  %v1863 = vunpack.c.l.b16 %v1233
  %v1864 = vunpack.c.l.b16 %v1234
  %v1865 = vunpack.c.h.b16 %v1234
  %v1866 = vunpack.c.l.b16 %v1235
  %v1867 = vunpack.c.h.b16 %v1235
  %v1868 = vunpack.c.l.b16 %v1236
  %v1869 = vunpack.c.h.b16 %v1236
  %v1870 = vunpack.c.l.b16 %v1237
  %v1871 = vunpack.c.l.b16 %v1238
  %v1872 = vunpack.c.h.b16 %v1238
  %v1873 = vunpack.c.l.b16 %v1239
  %v1874 = vunpack.c.h.b16 %v1239
  %v1875 = vunpack.c.l.b16 %v1240
  %v1876 = vunpack.c.h.b16 %v1240
  %v1877 = vunpack.c.l.b16 %v1241
  %v1878 = vunpack.c.l.b16 %v1242
  %v1879 = vunpack.c.h.b16 %v1242
  %v1880 = vunpack.c.l.b16 %v1243
  %v1881 = vunpack.c.h.b16 %v1243
  %v1882 = vunpack.c.l.b16 %v1244
  %v1883 = vunpack.c.h.b16 %v1244
  %v1884 = vunpack.c.l.b16 %v1245
  %v1885 = vunpack.c.l.b16 %v1246
  %v1886 = vunpack.c.h.b16 %v1246
  %v1887 = vunpack.c.l.b16 %v1247
  %v1888 = vunpack.c.h.b16 %v1247
  %v1889 = vunpack.c.l.b16 %v1248
  %v1890 = vunpack.c.h.b16 %v1248
  %v1891 = vunpack.c.l.b16 %v1249
  %v1892 = vunpack.c.l.b16 %v1250
  %v1893 = vunpack.c.h.b16 %v1250
  %v1894 = vunpack.c.l.b16 %v1251
  %v1895 = vunpack.c.h.b16 %v1251
  %v1896 = vunpack.c.l.b16 %v1252
  %v1897 = vunpack.c.h.b16 %v1252
  %v1898 = vunpack.c.l.b16 %v1253
  %v1899 = vunpack.c.l.b16 %v1254
  %v1900 = vunpack.c.h.b16 %v1254
  %v1901 = vunpack.c.l.b16 %v1255
  %v1902 = vunpack.c.h.b16 %v1255
  %v1903 = vunpack.c.l.b16 %v1256
  %v1904 = vunpack.c.h.b16 %v1256
  %v1905 = vunpack.c.l.b16 %v1257
  %v1906 = vunpack.c.l.b16 %v1258
  %v1907 = vunpack.c.h.b16 %v1258
  %v1908 = vunpack.c.l.b16 %v1259
  %v1909 = vunpack.c.h.b16 %v1259
  %v1910 = vunpack.c.l.b16 %v1260
  %v1911 = vunpack.c.h.b16 %v1260
  %v1912 = vunpack.c.l.b16 %v1261
  %v1913 = vunpack.c.l.b16 %v1262
  %v1914 = vunpack.c.h.b16 %v1262
  %v1915 = vunpack.c.l.b16 %v1263
  %v1916 = vunpack.c.h.b16 %v1263
  %v1917 = vunpack.c.l.b16 %v1264
  %v1918 = vunpack.c.h.b16 %v1264
  %v1919 = vunpack.c.l.b16 %v1265
  %v1920 = vunpack.c.l.b16 %v1266
  %v1921 = vunpack.c.h.b16 %v1266
  %v1922 = vunpack.c.l.b16 %v1267
  %v1923 = vunpack.c.h.b16 %v1267
  %v1924 = vunpack.c.l.b16 %v1268
  %v1925 = vunpack.c.h.b16 %v1268
  %v1926 = vunpack.c.l.b16 %v1269
  %v1927 = vunpack.c.l.b16 %v1270
  %v1928 = vunpack.c.h.b16 %v1270
  %v1929 = vunpack.c.l.b16 %v1271
  %v1930 = vunpack.c.h.b16 %v1271
  %v1931 = vunpack.c.l.b16 %v1272
  %v1932 = vunpack.c.h.b16 %v1272
  %v1933 = vunpack.c.l.b16 %v1273
  %v1934 = vunpack.c.l.b16 %v1274
  %v1935 = vunpack.c.h.b16 %v1274
  %v1936 = vunpack.c.l.b16 %v1275
  %v1937 = vunpack.c.h.b16 %v1275
  %v1938 = vunpack.c.l.b16 %v1276
  %v1939 = vunpack.c.h.b16 %v1276
  %v1940 = vunpack.c.l.b16 %v1277
  %v1941 = vunpack.c.l.b16 %v1278
  %v1942 = vunpack.c.h.b16 %v1278
  %v1943 = vunpack.c.l.b16 %v1279
  %v1944 = vunpack.c.h.b16 %v1279
  %v1945 = vunpack.c.l.b16 %v1280
  %v1946 = vunpack.c.h.b16 %v1280
  %v1947 = vunpack.c.l.b16 %v1281
  %v1948 = vunpack.c.l.b16 %v1282
  %v1949 = vunpack.c.h.b16 %v1282
  %v1950 = vunpack.c.l.b16 %v1283
  %v1951 = vunpack.c.h.b16 %v1283
  %v1952 = vunpack.c.l.b16 %v1284
  %v1953 = vunpack.c.h.b16 %v1284
  %v1954 = vunpack.c.l.b16 %v1285
  %v1955 = vunpack.c.l.b16 %v1286
  %v1956 = vunpack.c.h.b16 %v1286
  %v1957 = vunpack.c.l.b16 %v1287
  %v1958 = vunpack.c.h.b16 %v1287
  %v1959 = vunpack.c.l.b16 %v1288
  %v1960 = vunpack.c.h.b16 %v1288
  %v1961 = vunpack.c.l.b16 %v1289
  %v1962 = vunpack.c.l.b16 %v1290
  %v1963 = vunpack.c.h.b16 %v1290
  %v1964 = vunpack.c.l.b16 %v1291
  %v1965 = vunpack.c.h.b16 %v1291
  %v1966 = vunpack.c.l.b16 %v1292
  %v1967 = vunpack.c.h.b16 %v1292
  %v1968 = vunpack.c.l.b16 %v1293
  %v1969 = vunpack.c.l.b16 %v1294
  %v1970 = vunpack.c.h.b16 %v1294
  %v1971 = vunpack.c.l.b16 %v1295
  %v1972 = vunpack.c.h.b16 %v1295
  %v1973 = vunpack.c.l.b16 %v1296
  %v1974 = vunpack.c.h.b16 %v1296
  %v1975 = vunpack.c.l.b16 %v1297
  %v1976 = vunpack.c.l.b16 %v1298
  %v1977 = vunpack.c.h.b16 %v1298
  %v1978 = vunpack.c.l.b16 %v1299
  %v1979 = vunpack.c.h.b16 %v1299
  %v1980 = vunpack.c.l.b16 %v1300
  %v1981 = vunpack.c.h.b16 %v1300
  %v1982 = vunpack.c.l.b16 %v1301
  %v1983 = vunpack.c.l.b16 %v1302
  %v1984 = vunpack.c.h.b16 %v1302
  %v1985 = vunpack.c.l.b16 %v1303
  %v1986 = vunpack.c.h.b16 %v1303
  %v1987 = vunpack.c.l.b16 %v1304
  %v1988 = vunpack.c.h.b16 %v1304
  %v1989 = vunpack.c.l.b16 %v1305
  %v1990 = vunpack.c.l.b16 %v1306
  %v1991 = vunpack.c.h.b16 %v1306
  %v1992 = vunpack.c.l.b16 %v1307
  %v1993 = vunpack.c.h.b16 %v1307
  %v1994 = vunpack.c.l.b16 %v1308
  %v1995 = vunpack.c.h.b16 %v1308
  %v1996 = vunpack.c.l.b16 %v1309
  %v1997 = vunpack.c.l.b16 %v1310
  %v1998 = vunpack.c.h.b16 %v1310
  %v1999 = vunpack.c.l.b16 %v1311
  %v2000 = vunpack.c.h.b16 %v1311
  %v2001 = vunpack.c.l.b16 %v1312
  %v2002 = vunpack.c.h.b16 %v1312
  %v2003 = vunpack.c.l.b16 %v1313
  %v2004 = vunpack.c.l.b16 %v1314
  %v2005 = vunpack.c.h.b16 %v1314
  %v2006 = vunpack.c.l.b16 %v1315
  %v2007 = vunpack.c.h.b16 %v1315
  %v2008 = vunpack.c.l.b16 %v1316
  %v2009 = vunpack.c.h.b16 %v1316
  %v2010 = vunpack.c.l.b16 %v1317
  %v2011 = vunpack.c.l.b16 %v1318
  %v2012 = vunpack.c.h.b16 %v1318
  %v2013 = vunpack.c.l.b16 %v1319
  %v2014 = vunpack.c.h.b16 %v1319
  %v2015 = vunpack.c.l.b16 %v1320
  %v2016 = vunpack.c.h.b16 %v1320
  %v2017 = vunpack.c.l.b16 %v1321
  %v2018 = vunpack.c.l.b16 %v1322
  %v2019 = vunpack.c.h.b16 %v1322
  %v2020 = vunpack.c.l.b16 %v1323
  %v2021 = vunpack.c.h.b16 %v1323
  %v2022 = vunpack.c.l.b16 %v1324
  %v2023 = vunpack.c.h.b16 %v1324
  %v2024 = vunpack.c.l.b16 %v1325
  %v2025 = vunpack.c.l.b16 %v1326
  %v2026 = vunpack.c.h.b16 %v1326
  %v2027 = vunpack.c.l.b16 %v1327
  %v2028 = vunpack.c.h.b16 %v1327
  %v2029 = vunpack.c.l.b16 %v1328
  %v2030 = vunpack.c.h.b16 %v1328
  %v2031 = vunpack.c.l.b16 %v1329
  %v2032 = vunpack.c.l.b16 %v1330
  %v2033 = vunpack.c.h.b16 %v1330
  %v2034 = vunpack.c.l.b16 %v1331
  %v2035 = vunpack.c.h.b16 %v1331
  %v2036 = vunpack.c.l.b16 %v1332
  %v2037 = vunpack.c.h.b16 %v1332
  %v2038 = vunpack.c.l.b16 %v1333
  %v2039 = vunpack.c.l.b16 %v1334
  %v2040 = vunpack.c.h.b16 %v1334
  %v2041 = vunpack.c.l.b16 %v1335
  %v2042 = vunpack.c.h.b16 %v1335
  %v2043 = vunpack.c.l.b16 %v1336
  %v2044 = vunpack.c.h.b16 %v1336
  %v2045 = vunpack.c.l.b16 %v1337
  %v2046 = vunpack.c.l.b16 %v1338
  %v2047 = vunpack.c.h.b16 %v1338
  %v2048 = vunpack.c.l.b16 %v1339
  %v2049 = vunpack.c.h.b16 %v1339
  %v2050 = vunpack.c.l.b16 %v1340
  %v2051 = vunpack.c.h.b16 %v1340
  %v2052 = vunpack.c.l.b16 %v1341
  %v2053 = vunpack.c.l.b16 %v1342
  %v2054 = vunpack.c.h.b16 %v1342
  %v2055 = vunpack.c.l.b16 %v1343
  %v2056 = vunpack.c.h.b16 %v1343
  %v2057 = vunpack.c.l.b16 %v1344
  %v2058 = vunpack.c.h.b16 %v1344
  %v2059 = vunpack.c.l.b16 %v1345
  %v2060 = vunpack.c.l.b16 %v1346
  %v2061 = vunpack.c.h.b16 %v1346
  %v2062 = vunpack.c.l.b16 %v1347
  %v2063 = vunpack.c.h.b16 %v1347
  %v2064 = vunpack.c.l.b16 %v1348
  %v2065 = vunpack.c.h.b16 %v1348
  %v2066 = vunpack.c.l.b16 %v1349
  %v2067 = vunpack.c.l.b16 %v1350
  %v2068 = vunpack.c.h.b16 %v1350
  %v2069 = vunpack.c.l.b16 %v1351
  %v2070 = vunpack.c.h.b16 %v1351
  %v2071 = vunpack.c.l.b16 %v1352
  %v2072 = vunpack.c.h.b16 %v1352
  %v2073 = vunpack.c.l.b16 %v1353
  %v2074 = vunpack.c.l.b16 %v1354
  %v2075 = vunpack.c.h.b16 %v1354
  %v2076 = vunpack.c.l.b16 %v1355
  %v2077 = vunpack.c.h.b16 %v1355
  %v2078 = vunpack.c.l.b16 %v1356
  %v2079 = vunpack.c.h.b16 %v1356
  %v2080 = vunpack.c.l.b16 %v1357
  %v2081 = vunpack.c.l.b16 %v1358
  %v2082 = vunpack.c.h.b16 %v1358
  %v2083 = vunpack.c.l.b16 %v1359
  %v2084 = vunpack.c.h.b16 %v1359
  %v2085 = vunpack.c.l.b16 %v1360
  %v2086 = vunpack.c.h.b16 %v1360
  %v2087 = vunpack.c.l.b16 %v1361
  %v2088 = vunpack.c.l.b16 %v1362
  %v2089 = vunpack.c.h.b16 %v1362
  %v2090 = vunpack.c.l.b16 %v1363
  %v2091 = vunpack.c.h.b16 %v1363
  %v2092 = vunpack.c.l.b16 %v1364
  %v2093 = vunpack.c.h.b16 %v1364
  %v2094 = vunpack.c.l.b16 %v1365
  %v2095 = vunpack.c.l.b16 %v1366
  %v2096 = vunpack.c.h.b16 %v1366
  %v2097 = vunpack.c.l.b16 %v1367
  %v2098 = vunpack.c.h.b16 %v1367
  %v2099 = vunpack.c.l.b16 %v1368
  %v2100 = vunpack.c.h.b16 %v1368
  %v2101 = vunpack.c.l.b16 %v1369
  %v2102 = vunpack.c.l.b16 %v1370
  %v2103 = vunpack.c.h.b16 %v1370
  %v2104 = vunpack.c.l.b16 %v1371
  %v2105 = vunpack.c.h.b16 %v1371
  %v2106 = vunpack.c.l.b16 %v1372
  %v2107 = vunpack.c.h.b16 %v1372
  %v2108 = vunpack.c.l.b16 %v1373
  %v2109 = vunpack.c.l.b16 %v1374
  %v2110 = vunpack.c.h.b16 %v1374
  %v2111 = vunpack.c.l.b16 %v1375
  %v2112 = vunpack.c.h.b16 %v1375
  %v2113 = vunpack.c.l.b16 %v1376
  %v2114 = vunpack.c.h.b16 %v1376
  %v2115 = vunpack.c.l.b16 %v1377
  %v2116 = vunpack.c.l.b16 %v1378
  %v2117 = vunpack.c.h.b16 %v1378
  %v2118 = vunpack.c.l.b16 %v1379
  %v2119 = vunpack.c.h.b16 %v1379
  %v2120 = vunpack.c.l.b16 %v1380
  %v2121 = vunpack.c.h.b16 %v1380
  %v2122 = vunpack.c.l.b16 %v1381
  %v2123 = vpack.c.b16 %v1682, %v1675
  %v2124 = vpack.c.b16 %v1683, %v1676
  %v2125 = vpack.c.b16 %v1684, %v1677
  %v2126 = vpack.c.b16 %v1685, %v1678
  %v2127 = vpack.c.b16 %v1686, %v1679
  %v2128 = vpack.c.b16 %v1687, %v1680
  %v2129 = vpack.c.b16 %v1688, %v1681
  %v2130 = vpack.c.b16 %v1696, %v1689
  %v2131 = vpack.c.b16 %v1697, %v1690
  %v2132 = vpack.c.b16 %v1698, %v1691
  %v2133 = vpack.c.b16 %v1699, %v1692
  %v2134 = vpack.c.b16 %v1700, %v1693
  %v2135 = vpack.c.b16 %v1701, %v1694
  %v2136 = vpack.c.b16 %v1702, %v1695
  %v2137 = vpack.c.b16 %v1710, %v1703
  %v2138 = vpack.c.b16 %v1711, %v1704
  %v2139 = vpack.c.b16 %v1712, %v1705
  %v2140 = vpack.c.b16 %v1713, %v1706
  %v2141 = vpack.c.b16 %v1714, %v1707
  %v2142 = vpack.c.b16 %v1715, %v1708
  %v2143 = vpack.c.b16 %v1716, %v1709
  %v2144 = vpack.c.b16 %v1724, %v1717
  %v2145 = vpack.c.b16 %v1725, %v1718
  %v2146 = vpack.c.b16 %v1726, %v1719
  %v2147 = vpack.c.b16 %v1727, %v1720
  %v2148 = vpack.c.b16 %v1728, %v1721
  %v2149 = vpack.c.b16 %v1729, %v1722
  %v2150 = vpack.c.b16 %v1730, %v1723
  %v2151 = vpack.c.b16 %v1738, %v1731
  %v2152 = vpack.c.b16 %v1739, %v1732
  %v2153 = vpack.c.b16 %v1740, %v1733
  %v2154 = vpack.c.b16 %v1741, %v1734
  %v2155 = vpack.c.b16 %v1742, %v1735
  %v2156 = vpack.c.b16 %v1743, %v1736
  %v2157 = vpack.c.b16 %v1744, %v1737
  %v2158 = vpack.c.b16 %v1752, %v1745
  %v2159 = vpack.c.b16 %v1753, %v1746
  %v2160 = vpack.c.b16 %v1754, %v1747
  %v2161 = vpack.c.b16 %v1755, %v1748
  %v2162 = vpack.c.b16 %v1756, %v1749
  %v2163 = vpack.c.b16 %v1757, %v1750
  %v2164 = vpack.c.b16 %v1758, %v1751
  %v2165 = vpack.c.b16 %v1766, %v1759
  %v2166 = vpack.c.b16 %v1767, %v1760
  %v2167 = vpack.c.b16 %v1768, %v1761
  %v2168 = vpack.c.b16 %v1769, %v1762
  %v2169 = vpack.c.b16 %v1770, %v1763
  %v2170 = vpack.c.b16 %v1771, %v1764
  %v2171 = vpack.c.b16 %v1772, %v1765
  %v2172 = vpack.c.b16 %v1780, %v1773
  %v2173 = vpack.c.b16 %v1781, %v1774
  %v2174 = vpack.c.b16 %v1782, %v1775
  %v2175 = vpack.c.b16 %v1783, %v1776
  %v2176 = vpack.c.b16 %v1784, %v1777
  %v2177 = vpack.c.b16 %v1785, %v1778
  %v2178 = vpack.c.b16 %v1786, %v1779
  %v2179 = vpack.c.b16 %v1794, %v1787
  %v2180 = vpack.c.b16 %v1795, %v1788
  %v2181 = vpack.c.b16 %v1796, %v1789
  %v2182 = vpack.c.b16 %v1797, %v1790
  %v2183 = vpack.c.b16 %v1798, %v1791
  %v2184 = vpack.c.b16 %v1799, %v1792
  %v2185 = vpack.c.b16 %v1800, %v1793
  %v2186 = vpack.c.b16 %v1808, %v1801
  %v2187 = vpack.c.b16 %v1809, %v1802
  %v2188 = vpack.c.b16 %v1810, %v1803
  %v2189 = vpack.c.b16 %v1811, %v1804
  %v2190 = vpack.c.b16 %v1812, %v1805
  %v2191 = vpack.c.b16 %v1813, %v1806
  %v2192 = vpack.c.b16 %v1814, %v1807
  %v2193 = vpack.c.b16 %v1822, %v1815
  %v2194 = vpack.c.b16 %v1823, %v1816
  %v2195 = vpack.c.b16 %v1824, %v1817
  %v2196 = vpack.c.b16 %v1825, %v1818
  %v2197 = vpack.c.b16 %v1826, %v1819
  %v2198 = vpack.c.b16 %v1827, %v1820
  %v2199 = vpack.c.b16 %v1828, %v1821
  %v2200 = vpack.c.b16 %v1836, %v1829
  %v2201 = vpack.c.b16 %v1837, %v1830
  %v2202 = vpack.c.b16 %v1838, %v1831
  %v2203 = vpack.c.b16 %v1839, %v1832
  %v2204 = vpack.c.b16 %v1840, %v1833
  %v2205 = vpack.c.b16 %v1841, %v1834
  %v2206 = vpack.c.b16 %v1842, %v1835
  %v2207 = vpack.c.b16 %v1850, %v1843
  %v2208 = vpack.c.b16 %v1851, %v1844
  %v2209 = vpack.c.b16 %v1852, %v1845
  %v2210 = vpack.c.b16 %v1853, %v1846
  %v2211 = vpack.c.b16 %v1854, %v1847
  %v2212 = vpack.c.b16 %v1855, %v1848
  %v2213 = vpack.c.b16 %v1856, %v1849
  %v2214 = vpack.c.b16 %v1864, %v1857
  %v2215 = vpack.c.b16 %v1865, %v1858
  %v2216 = vpack.c.b16 %v1866, %v1859
  %v2217 = vpack.c.b16 %v1867, %v1860
  %v2218 = vpack.c.b16 %v1868, %v1861
  %v2219 = vpack.c.b16 %v1869, %v1862
  %v2220 = vpack.c.b16 %v1870, %v1863
  %v2221 = vpack.c.b16 %v1878, %v1871
  %v2222 = vpack.c.b16 %v1879, %v1872
  %v2223 = vpack.c.b16 %v1880, %v1873
  %v2224 = vpack.c.b16 %v1881, %v1874
  %v2225 = vpack.c.b16 %v1882, %v1875
  %v2226 = vpack.c.b16 %v1883, %v1876
  %v2227 = vpack.c.b16 %v1884, %v1877
  %v2228 = vpack.c.b16 %v1892, %v1885
  %v2229 = vpack.c.b16 %v1893, %v1886
  %v2230 = vpack.c.b16 %v1894, %v1887
  %v2231 = vpack.c.b16 %v1895, %v1888
  %v2232 = vpack.c.b16 %v1896, %v1889
  %v2233 = vpack.c.b16 %v1897, %v1890
  %v2234 = vpack.c.b16 %v1898, %v1891
  %v2235 = vpack.c.b16 %v1906, %v1899
  %v2236 = vpack.c.b16 %v1907, %v1900
  %v2237 = vpack.c.b16 %v1908, %v1901
  %v2238 = vpack.c.b16 %v1909, %v1902
  %v2239 = vpack.c.b16 %v1910, %v1903
  %v2240 = vpack.c.b16 %v1911, %v1904
  %v2241 = vpack.c.b16 %v1912, %v1905
  %v2242 = vpack.c.b16 %v1920, %v1913
  %v2243 = vpack.c.b16 %v1921, %v1914
  %v2244 = vpack.c.b16 %v1922, %v1915
  %v2245 = vpack.c.b16 %v1923, %v1916
  %v2246 = vpack.c.b16 %v1924, %v1917
  %v2247 = vpack.c.b16 %v1925, %v1918
  %v2248 = vpack.c.b16 %v1926, %v1919
  %v2249 = vpack.c.b16 %v1934, %v1927
  %v2250 = vpack.c.b16 %v1935, %v1928
  %v2251 = vpack.c.b16 %v1936, %v1929
  %v2252 = vpack.c.b16 %v1937, %v1930
  %v2253 = vpack.c.b16 %v1938, %v1931
  %v2254 = vpack.c.b16 %v1939, %v1932
  %v2255 = vpack.c.b16 %v1940, %v1933
  %v2256 = vpack.c.b16 %v1948, %v1941
  %v2257 = vpack.c.b16 %v1949, %v1942
  %v2258 = vpack.c.b16 %v1950, %v1943
  %v2259 = vpack.c.b16 %v1951, %v1944
  %v2260 = vpack.c.b16 %v1952, %v1945
  %v2261 = vpack.c.b16 %v1953, %v1946
  %v2262 = vpack.c.b16 %v1954, %v1947
  %v2263 = vpack.c.b16 %v1962, %v1955
  %v2264 = vpack.c.b16 %v1963, %v1956
  %v2265 = vpack.c.b16 %v1964, %v1957
  %v2266 = vpack.c.b16 %v1965, %v1958
  %v2267 = vpack.c.b16 %v1966, %v1959
  %v2268 = vpack.c.b16 %v1967, %v1960
  %v2269 = vpack.c.b16 %v1968, %v1961
  %v2270 = vpack.c.b16 %v1976, %v1969
  %v2271 = vpack.c.b16 %v1977, %v1970
  %v2272 = vpack.c.b16 %v1978, %v1971
  %v2273 = vpack.c.b16 %v1979, %v1972
  %v2274 = vpack.c.b16 %v1980, %v1973
  %v2275 = vpack.c.b16 %v1981, %v1974
  %v2276 = vpack.c.b16 %v1982, %v1975
  %v2277 = vpack.c.b16 %v1990, %v1983
  %v2278 = vpack.c.b16 %v1991, %v1984
  %v2279 = vpack.c.b16 %v1992, %v1985
  %v2280 = vpack.c.b16 %v1993, %v1986
  %v2281 = vpack.c.b16 %v1994, %v1987
  %v2282 = vpack.c.b16 %v1995, %v1988
  %v2283 = vpack.c.b16 %v1996, %v1989
  %v2284 = vpack.c.b16 %v2004, %v1997
  %v2285 = vpack.c.b16 %v2005, %v1998
  %v2286 = vpack.c.b16 %v2006, %v1999
  %v2287 = vpack.c.b16 %v2007, %v2000
  %v2288 = vpack.c.b16 %v2008, %v2001
  %v2289 = vpack.c.b16 %v2009, %v2002
  %v2290 = vpack.c.b16 %v2010, %v2003
  %v2291 = vpack.c.b16 %v2018, %v2011
  %v2292 = vpack.c.b16 %v2019, %v2012
  %v2293 = vpack.c.b16 %v2020, %v2013
  %v2294 = vpack.c.b16 %v2021, %v2014
  %v2295 = vpack.c.b16 %v2022, %v2015
  %v2296 = vpack.c.b16 %v2023, %v2016
  %v2297 = vpack.c.b16 %v2024, %v2017
  %v2298 = vpack.c.b16 %v2032, %v2025
  %v2299 = vpack.c.b16 %v2033, %v2026
  %v2300 = vpack.c.b16 %v2034, %v2027
  %v2301 = vpack.c.b16 %v2035, %v2028
  %v2302 = vpack.c.b16 %v2036, %v2029
  %v2303 = vpack.c.b16 %v2037, %v2030
  %v2304 = vpack.c.b16 %v2038, %v2031
  %v2305 = vpack.c.b16 %v2046, %v2039
  %v2306 = vpack.c.b16 %v2047, %v2040
  %v2307 = vpack.c.b16 %v2048, %v2041
  %v2308 = vpack.c.b16 %v2049, %v2042
  %v2309 = vpack.c.b16 %v2050, %v2043
  %v2310 = vpack.c.b16 %v2051, %v2044
  %v2311 = vpack.c.b16 %v2052, %v2045
  %v2312 = vpack.c.b16 %v2060, %v2053
  %v2313 = vpack.c.b16 %v2061, %v2054
  %v2314 = vpack.c.b16 %v2062, %v2055
  %v2315 = vpack.c.b16 %v2063, %v2056
  %v2316 = vpack.c.b16 %v2064, %v2057
  %v2317 = vpack.c.b16 %v2065, %v2058
  %v2318 = vpack.c.b16 %v2066, %v2059
  %v2319 = vpack.c.b16 %v2074, %v2067
  %v2320 = vpack.c.b16 %v2075, %v2068
  %v2321 = vpack.c.b16 %v2076, %v2069
  %v2322 = vpack.c.b16 %v2077, %v2070
  %v2323 = vpack.c.b16 %v2078, %v2071
  %v2324 = vpack.c.b16 %v2079, %v2072
  %v2325 = vpack.c.b16 %v2080, %v2073
  %v2326 = vpack.c.b16 %v2088, %v2081
  %v2327 = vpack.c.b16 %v2089, %v2082
  %v2328 = vpack.c.b16 %v2090, %v2083
  %v2329 = vpack.c.b16 %v2091, %v2084
  %v2330 = vpack.c.b16 %v2092, %v2085
  %v2331 = vpack.c.b16 %v2093, %v2086
  %v2332 = vpack.c.b16 %v2094, %v2087
  %v2333 = vpack.c.b16 %v2102, %v2095
  %v2334 = vpack.c.b16 %v2103, %v2096
  %v2335 = vpack.c.b16 %v2104, %v2097
  %v2336 = vpack.c.b16 %v2105, %v2098
  %v2337 = vpack.c.b16 %v2106, %v2099
  %v2338 = vpack.c.b16 %v2107, %v2100
  %v2339 = vpack.c.b16 %v2108, %v2101
  %v2340 = vpack.c.b16 %v2116, %v2109
  %v2341 = vpack.c.b16 %v2117, %v2110
  %v2342 = vpack.c.b16 %v2118, %v2111
  %v2343 = vpack.c.b16 %v2119, %v2112
  %v2344 = vpack.c.b16 %v2120, %v2113
  %v2345 = vpack.c.b16 %v2121, %v2114
  %v2346 = vpack.c.b16 %v2122, %v2115
  %2571 = vmatprep.subr.bf16.mxu0 %v2124
  %2572 = vmatpush1.bf16.msra.mxu0 %v2123
  %2573 = vmatprep.subr.bf16.mxu0 %v2131
  %2574 = vmatpush1.bf16.msra.mxu0 %v2130
  %2575 = vmatprep.subr.bf16.mxu0 %v2138
  %2576 = vmatpush1.bf16.msra.mxu0 %v2137
  %2577 = vmatprep.subr.bf16.mxu0 %v2145
  %2578 = vmatpush1.bf16.msra.mxu0 %v2144
  %2579 = vmatprep.subr.bf16.mxu0 %v2152
  %2580 = vmatpush1.bf16.msra.mxu0 %v2151
  %2581 = vmatprep.subr.bf16.mxu0 %v2159
  %2582 = vmatpush1.bf16.msra.mxu0 %v2158
  %2583 = vmatprep.subr.bf16.mxu0 %v2166
  %2584 = vmatpush1.bf16.msra.mxu0 %v2165
  %2585 = vmatprep.subr.bf16.mxu0 %v2173
  %2586 = vmatpush1.bf16.msra.mxu0 %v2172
  %2587 = vmatprep.subr.bf16.mxu0 %v2180
  %2588 = vmatpush1.bf16.msra.mxu0 %v2179
  %2589 = vmatprep.subr.bf16.mxu0 %v2187
  %2590 = vmatpush1.bf16.msra.mxu0 %v2186
  %2591 = vmatprep.subr.bf16.mxu0 %v2194
  %2592 = vmatpush1.bf16.msra.mxu0 %v2193
  %2593 = vmatprep.subr.bf16.mxu0 %v2201
  %2594 = vmatpush1.bf16.msra.mxu0 %v2200
  %2595 = vmatprep.subr.bf16.mxu0 %v2208
  %2596 = vmatpush1.bf16.msra.mxu0 %v2207
  %2597 = vmatprep.subr.bf16.mxu0 %v2215
  %2598 = vmatpush1.bf16.msra.mxu0 %v2214
  %2599 = vmatprep.subr.bf16.mxu0 %v2222
  %2600 = vmatpush1.bf16.msra.mxu0 %v2221
  %2601 = vmatprep.subr.bf16.mxu0 %v2229
  %2602 = vmatpush1.bf16.msra.mxu0 %v2228
  %2603 = vmatprep.mubr.bf16.mxu0 %v1123
  %2604 = vmatmul.mubr.bf16.gmra.mrb[0].mxu0 %v1122
  %v2605 = vpop.f32.mrb[0].mxu0
  %v2606 = vadd.f32 %v1387, %v2605
  %v2607 = vpop.f32.mrb[0].mxu0
  %v2608 = vadd.f32 %v1391, %v2607
  %v2609 = vpop.f32.mrb[0].mxu0
  %v2610 = vadd.f32 %v1387, %v2609
  %v2611 = vpop.f32.mrb[0].mxu0
  %v2612 = vadd.f32 %v1391, %v2611
  %2613 = vdwg.mxu0
  %2614 = vmatprep.subr.bf16.mxu0 %v2236
  %2615 = vmatpush1.bf16.msra.mxu0 %v2235
  %2616 = vmatprep.subr.bf16.mxu0 %v2243
  %2617 = vmatpush1.bf16.msra.mxu0 %v2242
  %2618 = vmatprep.subr.bf16.mxu0 %v2250
  %2619 = vmatpush1.bf16.msra.mxu0 %v2249
  %2620 = vmatprep.subr.bf16.mxu0 %v2257
  %2621 = vmatpush1.bf16.msra.mxu0 %v2256
  %2622 = vmatprep.subr.bf16.mxu0 %v2264
  %2623 = vmatpush1.bf16.msra.mxu0 %v2263
  %2624 = vmatprep.subr.bf16.mxu0 %v2271
  %2625 = vmatpush1.bf16.msra.mxu0 %v2270
  %2626 = vmatprep.subr.bf16.mxu0 %v2278
  %2627 = vmatpush1.bf16.msra.mxu0 %v2277
  %2628 = vmatprep.subr.bf16.mxu0 %v2285
  %2629 = vmatpush1.bf16.msra.mxu0 %v2284
  %2630 = vmatprep.subr.bf16.mxu0 %v2292
  %2631 = vmatpush1.bf16.msra.mxu0 %v2291
  %2632 = vmatprep.subr.bf16.mxu0 %v2299
  %2633 = vmatpush1.bf16.msra.mxu0 %v2298
  %2634 = vmatprep.subr.bf16.mxu0 %v2306
  %2635 = vmatpush1.bf16.msra.mxu0 %v2305
  %2636 = vmatprep.subr.bf16.mxu0 %v2313
  %2637 = vmatpush1.bf16.msra.mxu0 %v2312
  %2638 = vmatprep.subr.bf16.mxu0 %v2320
  %2639 = vmatpush1.bf16.msra.mxu0 %v2319
  %2640 = vmatprep.subr.bf16.mxu0 %v2327
  %2641 = vmatpush1.bf16.msra.mxu0 %v2326
  %2642 = vmatprep.subr.bf16.mxu0 %v2334
  %2643 = vmatpush1.bf16.msra.mxu0 %v2333
  %2644 = vmatprep.subr.bf16.mxu0 %v2341
  %2645 = vmatpush1.bf16.msra.mxu0 %v2340
  %2646 = vmatprep.mubr.bf16.mxu0 %v1125
  %2647 = vmatmul.mubr.bf16.gmra.mrb[0].mxu0 %v1124
  %v2648 = vpop.f32.mrb[0].mxu0
  %v2649 = vadd.f32 %v2606, %v2648
  %v2650 = vpop.f32.mrb[0].mxu0
  %v2651 = vadd.f32 %v2608, %v2650
  %v2652 = vpop.f32.mrb[0].mxu0
  %v2653 = vadd.f32 %v2610, %v2652
  %v2654 = vpop.f32.mrb[0].mxu0
  %v2655 = vadd.f32 %v2612, %v2654
  %2656 = vdwg.mxu0
  %2657 = vmatprep.subr.bf16.mxu0 %v2126
  %2658 = vmatpush1.bf16.msra.mxu0 %v2125
  %2659 = vmatprep.subr.bf16.mxu0 %v2133
  %2660 = vmatpush1.bf16.msra.mxu0 %v2132
  %2661 = vmatprep.subr.bf16.mxu0 %v2140
  %2662 = vmatpush1.bf16.msra.mxu0 %v2139
  %2663 = vmatprep.subr.bf16.mxu0 %v2147
  %2664 = vmatpush1.bf16.msra.mxu0 %v2146
  %2665 = vmatprep.subr.bf16.mxu0 %v2154
  %2666 = vmatpush1.bf16.msra.mxu0 %v2153
  %2667 = vmatprep.subr.bf16.mxu0 %v2161
  %2668 = vmatpush1.bf16.msra.mxu0 %v2160
  %2669 = vmatprep.subr.bf16.mxu0 %v2168
  %2670 = vmatpush1.bf16.msra.mxu0 %v2167
  %2671 = vmatprep.subr.bf16.mxu0 %v2175
  %2672 = vmatpush1.bf16.msra.mxu0 %v2174
  %2673 = vmatprep.subr.bf16.mxu0 %v2182
  %2674 = vmatpush1.bf16.msra.mxu0 %v2181
  %2675 = vmatprep.subr.bf16.mxu0 %v2189
  %2676 = vmatpush1.bf16.msra.mxu0 %v2188
  %2677 = vmatprep.subr.bf16.mxu0 %v2196
  %2678 = vmatpush1.bf16.msra.mxu0 %v2195
  %2679 = vmatprep.subr.bf16.mxu0 %v2203
  %2680 = vmatpush1.bf16.msra.mxu0 %v2202
  %2681 = vmatprep.subr.bf16.mxu0 %v2210
  %2682 = vmatpush1.bf16.msra.mxu0 %v2209
  %2683 = vmatprep.subr.bf16.mxu0 %v2217
  %2684 = vmatpush1.bf16.msra.mxu0 %v2216
  %2685 = vmatprep.subr.bf16.mxu0 %v2224
  %2686 = vmatpush1.bf16.msra.mxu0 %v2223
  %2687 = vmatprep.subr.bf16.mxu0 %v2231
  %2688 = vmatpush1.bf16.msra.mxu0 %v2230
  %2689 = vmatprep.mubr.bf16.mxu0 %v1123
  %2690 = vmatmul.mubr.bf16.gmra.mrb[0].mxu0 %v1122
  %v2691 = vpop.f32.mrb[0].mxu0
  %v2692 = vadd.f32 %v1395, %v2691
  %v2693 = vpop.f32.mrb[0].mxu0
  %v2694 = vadd.f32 %v1399, %v2693
  %v2695 = vpop.f32.mrb[0].mxu0
  %v2696 = vadd.f32 %v1395, %v2695
  %v2697 = vpop.f32.mrb[0].mxu0
  %v2698 = vadd.f32 %v1399, %v2697
  %2699 = vdwg.mxu0
  %2700 = vmatprep.subr.bf16.mxu0 %v2238
  %2701 = vmatpush1.bf16.msra.mxu0 %v2237
  %2702 = vmatprep.subr.bf16.mxu0 %v2245
  %2703 = vmatpush1.bf16.msra.mxu0 %v2244
  %2704 = vmatprep.subr.bf16.mxu0 %v2252
  %2705 = vmatpush1.bf16.msra.mxu0 %v2251
  %2706 = vmatprep.subr.bf16.mxu0 %v2259
  %2707 = vmatpush1.bf16.msra.mxu0 %v2258
  %2708 = vmatprep.subr.bf16.mxu0 %v2266
  %2709 = vmatpush1.bf16.msra.mxu0 %v2265
  %2710 = vmatprep.subr.bf16.mxu0 %v2273
  %2711 = vmatpush1.bf16.msra.mxu0 %v2272
  %2712 = vmatprep.subr.bf16.mxu0 %v2280
  %2713 = vmatpush1.bf16.msra.mxu0 %v2279
  %2714 = vmatprep.subr.bf16.mxu0 %v2287
  %2715 = vmatpush1.bf16.msra.mxu0 %v2286
  %2716 = vmatprep.subr.bf16.mxu0 %v2294
  %2717 = vmatpush1.bf16.msra.mxu0 %v2293
  %2718 = vmatprep.subr.bf16.mxu0 %v2301
  %2719 = vmatpush1.bf16.msra.mxu0 %v2300
  %2720 = vmatprep.subr.bf16.mxu0 %v2308
  %2721 = vmatpush1.bf16.msra.mxu0 %v2307
  %2722 = vmatprep.subr.bf16.mxu0 %v2315
  %2723 = vmatpush1.bf16.msra.mxu0 %v2314
  %2724 = vmatprep.subr.bf16.mxu0 %v2322
  %2725 = vmatpush1.bf16.msra.mxu0 %v2321
  %2726 = vmatprep.subr.bf16.mxu0 %v2329
  %2727 = vmatpush1.bf16.msra.mxu0 %v2328
  %2728 = vmatprep.subr.bf16.mxu0 %v2336
  %2729 = vmatpush1.bf16.msra.mxu0 %v2335
  %2730 = vmatprep.subr.bf16.mxu0 %v2343
  %2731 = vmatpush1.bf16.msra.mxu0 %v2342
  %2732 = vmatprep.mubr.bf16.mxu0 %v1125
  %2733 = vmatmul.mubr.bf16.gmra.mrb[0].mxu0 %v1124
  %v2734 = vpop.f32.mrb[0].mxu0
  %v2735 = vadd.f32 %v2692, %v2734
  %v2736 = vpop.f32.mrb[0].mxu0
  %v2737 = vadd.f32 %v2694, %v2736
  %v2738 = vpop.f32.mrb[0].mxu0
  %v2739 = vadd.f32 %v2696, %v2738
  %v2740 = vpop.f32.mrb[0].mxu0
  %v2741 = vadd.f32 %v2698, %v2740
  %2742 = vdwg.mxu0
  %2743 = vmatprep.subr.bf16.mxu0 %v2128
  %2744 = vmatpush1.bf16.msra.mxu0 %v2127
  %2745 = vmatprep.subr.bf16.mxu0 %v2135
  %2746 = vmatpush1.bf16.msra.mxu0 %v2134
  %2747 = vmatprep.subr.bf16.mxu0 %v2142
  %2748 = vmatpush1.bf16.msra.mxu0 %v2141
  %2749 = vmatprep.subr.bf16.mxu0 %v2149
  %2750 = vmatpush1.bf16.msra.mxu0 %v2148
  %2751 = vmatprep.subr.bf16.mxu0 %v2156
  %2752 = vmatpush1.bf16.msra.mxu0 %v2155
  %2753 = vmatprep.subr.bf16.mxu0 %v2163
  %2754 = vmatpush1.bf16.msra.mxu0 %v2162
  %2755 = vmatprep.subr.bf16.mxu0 %v2170
  %2756 = vmatpush1.bf16.msra.mxu0 %v2169
  %2757 = vmatprep.subr.bf16.mxu0 %v2177
  %2758 = vmatpush1.bf16.msra.mxu0 %v2176
  %2759 = vmatprep.subr.bf16.mxu0 %v2184
  %2760 = vmatpush1.bf16.msra.mxu0 %v2183
  %2761 = vmatprep.subr.bf16.mxu0 %v2191
  %2762 = vmatpush1.bf16.msra.mxu0 %v2190
  %2763 = vmatprep.subr.bf16.mxu0 %v2198
  %2764 = vmatpush1.bf16.msra.mxu0 %v2197
  %2765 = vmatprep.subr.bf16.mxu0 %v2205
  %2766 = vmatpush1.bf16.msra.mxu0 %v2204
  %2767 = vmatprep.subr.bf16.mxu0 %v2212
  %2768 = vmatpush1.bf16.msra.mxu0 %v2211
  %2769 = vmatprep.subr.bf16.mxu0 %v2219
  %2770 = vmatpush1.bf16.msra.mxu0 %v2218
  %2771 = vmatprep.subr.bf16.mxu0 %v2226
  %2772 = vmatpush1.bf16.msra.mxu0 %v2225
  %2773 = vmatprep.subr.bf16.mxu0 %v2233
  %2774 = vmatpush1.bf16.msra.mxu0 %v2232
  %2775 = vmatprep.mubr.bf16.mxu0 %v1123
  %2776 = vmatmul.mubr.bf16.gmra.mrb[0].mxu0 %v1122
  %v2777 = vpop.f32.mrb[0].mxu0
  %v2778 = vadd.f32 %v1403, %v2777
  %v2779 = vpop.f32.mrb[0].mxu0
  %v2780 = vadd.f32 %v1407, %v2779
  %v2781 = vpop.f32.mrb[0].mxu0
  %v2782 = vadd.f32 %v1403, %v2781
  %v2783 = vpop.f32.mrb[0].mxu0
  %v2784 = vadd.f32 %v1407, %v2783
  %2785 = vdwg.mxu0
  %2786 = vmatprep.subr.bf16.mxu0 %v2240
  %2787 = vmatpush1.bf16.msra.mxu0 %v2239
  %2788 = vmatprep.subr.bf16.mxu0 %v2247
  %2789 = vmatpush1.bf16.msra.mxu0 %v2246
  %2790 = vmatprep.subr.bf16.mxu0 %v2254
  %2791 = vmatpush1.bf16.msra.mxu0 %v2253
  %2792 = vmatprep.subr.bf16.mxu0 %v2261
  %2793 = vmatpush1.bf16.msra.mxu0 %v2260
  %2794 = vmatprep.subr.bf16.mxu0 %v2268
  %2795 = vmatpush1.bf16.msra.mxu0 %v2267
  %2796 = vmatprep.subr.bf16.mxu0 %v2275
  %2797 = vmatpush1.bf16.msra.mxu0 %v2274
  %2798 = vmatprep.subr.bf16.mxu0 %v2282
  %2799 = vmatpush1.bf16.msra.mxu0 %v2281
  %2800 = vmatprep.subr.bf16.mxu0 %v2289
  %2801 = vmatpush1.bf16.msra.mxu0 %v2288
  %2802 = vmatprep.subr.bf16.mxu0 %v2296
  %2803 = vmatpush1.bf16.msra.mxu0 %v2295
  %2804 = vmatprep.subr.bf16.mxu0 %v2303
  %2805 = vmatpush1.bf16.msra.mxu0 %v2302
  %2806 = vmatprep.subr.bf16.mxu0 %v2310
  %2807 = vmatpush1.bf16.msra.mxu0 %v2309
  %2808 = vmatprep.subr.bf16.mxu0 %v2317
  %2809 = vmatpush1.bf16.msra.mxu0 %v2316
  %2810 = vmatprep.subr.bf16.mxu0 %v2324
  %2811 = vmatpush1.bf16.msra.mxu0 %v2323
  %2812 = vmatprep.subr.bf16.mxu0 %v2331
  %2813 = vmatpush1.bf16.msra.mxu0 %v2330
  %2814 = vmatprep.subr.bf16.mxu0 %v2338
  %2815 = vmatpush1.bf16.msra.mxu0 %v2337
  %2816 = vmatprep.subr.bf16.mxu0 %v2345
  %2817 = vmatpush1.bf16.msra.mxu0 %v2344
  %2818 = vmatprep.mubr.bf16.mxu0 %v1125
  %2819 = vmatmul.mubr.bf16.gmra.mrb[0].mxu0 %v1124
  %v2820 = vpop.f32.mrb[0].mxu0
  %v2821 = vadd.f32 %v2778, %v2820
  %v2822 = vpop.f32.mrb[0].mxu0
  %v2823 = vadd.f32 %v2780, %v2822
  %v2824 = vpop.f32.mrb[0].mxu0
  %v2825 = vadd.f32 %v2782, %v2824
  %v2826 = vpop.f32.mrb[0].mxu0
  %v2827 = vadd.f32 %v2784, %v2826
  %2828 = vdwg.mxu0
  %2829 = vmatprep.subr.bf16.mxu0 0
  %2830 = vmatpush1.bf16.msra.mxu0 %v2129
  %2831 = vmatprep.subr.bf16.mxu0 0
  %2832 = vmatpush1.bf16.msra.mxu0 %v2136
  %2833 = vmatprep.subr.bf16.mxu0 0
  %2834 = vmatpush1.bf16.msra.mxu0 %v2143
  %2835 = vmatprep.subr.bf16.mxu0 0
  %2836 = vmatpush1.bf16.msra.mxu0 %v2150
  %2837 = vmatprep.subr.bf16.mxu0 0
  %2838 = vmatpush1.bf16.msra.mxu0 %v2157
  %2839 = vmatprep.subr.bf16.mxu0 0
  %2840 = vmatpush1.bf16.msra.mxu0 %v2164
  %2841 = vmatprep.subr.bf16.mxu0 0
  %2842 = vmatpush1.bf16.msra.mxu0 %v2171
  %2843 = vmatprep.subr.bf16.mxu0 0
  %2844 = vmatpush1.bf16.msra.mxu0 %v2178
  %2845 = vmatprep.subr.bf16.mxu0 0
  %2846 = vmatpush1.bf16.msra.mxu0 %v2185
  %2847 = vmatprep.subr.bf16.mxu0 0
  %2848 = vmatpush1.bf16.msra.mxu0 %v2192
  %2849 = vmatprep.subr.bf16.mxu0 0
  %2850 = vmatpush1.bf16.msra.mxu0 %v2199
  %2851 = vmatprep.subr.bf16.mxu0 0
  %2852 = vmatpush1.bf16.msra.mxu0 %v2206
  %2853 = vmatprep.subr.bf16.mxu0 0
  %2854 = vmatpush1.bf16.msra.mxu0 %v2213
  %2855 = vmatprep.subr.bf16.mxu0 0
  %2856 = vmatpush1.bf16.msra.mxu0 %v2220
  %2857 = vmatprep.subr.bf16.mxu0 0
  %2858 = vmatpush1.bf16.msra.mxu0 %v2227
  %2859 = vmatprep.subr.bf16.mxu0 0
  %2860 = vmatpush1.bf16.msra.mxu0 %v2234
  %2861 = vmatprep.mubr.bf16.mxu0 %v1123
  %2862 = vmatmul.mubr.bf16.gmra.mrb[0].mxu0 %v1122
  %v2863 = vpop.f32.mrb[0].mxu0
  %v2864 = vadd.f32 %v1411, %v2863
  %v2865 = vpop.f32.mrb[0].mxu0
  %v2866 = vpop.f32.mrb[0].mxu0
  %v2867 = vadd.f32 %v1411, %v2866
  %v2868 = vpop.f32.mrb[0].mxu0
  %2869 = vdwg.mxu0
  %2870 = vmatprep.subr.bf16.mxu0 0
  %2871 = vmatpush1.bf16.msra.mxu0 %v2241
  %2872 = vmatprep.subr.bf16.mxu0 0
  %2873 = vmatpush1.bf16.msra.mxu0 %v2248
  %2874 = vmatprep.subr.bf16.mxu0 0
  %2875 = vmatpush1.bf16.msra.mxu0 %v2255
  %2876 = vmatprep.subr.bf16.mxu0 0
  %2877 = vmatpush1.bf16.msra.mxu0 %v2262
  %2878 = vmatprep.subr.bf16.mxu0 0
  %2879 = vmatpush1.bf16.msra.mxu0 %v2269
  %2880 = vmatprep.subr.bf16.mxu0 0
  %2881 = vmatpush1.bf16.msra.mxu0 %v2276
  %2882 = vmatprep.subr.bf16.mxu0 0
  %2883 = vmatpush1.bf16.msra.mxu0 %v2283
  %2884 = vmatprep.subr.bf16.mxu0 0
  %2885 = vmatpush1.bf16.msra.mxu0 %v2290
  %2886 = vmatprep.subr.bf16.mxu0 0
  %2887 = vmatpush1.bf16.msra.mxu0 %v2297
  %2888 = vmatprep.subr.bf16.mxu0 0
  %2889 = vmatpush1.bf16.msra.mxu0 %v2304
  %2890 = vmatprep.subr.bf16.mxu0 0
  %2891 = vmatpush1.bf16.msra.mxu0 %v2311
  %2892 = vmatprep.subr.bf16.mxu0 0
  %2893 = vmatpush1.bf16.msra.mxu0 %v2318
  %2894 = vmatprep.subr.bf16.mxu0 0
  %2895 = vmatpush1.bf16.msra.mxu0 %v2325
  %2896 = vmatprep.subr.bf16.mxu0 0
  %2897 = vmatpush1.bf16.msra.mxu0 %v2332
  %2898 = vmatprep.subr.bf16.mxu0 0
  %2899 = vmatpush1.bf16.msra.mxu0 %v2339
  %2900 = vmatprep.subr.bf16.mxu0 0
  %2901 = vmatpush1.bf16.msra.mxu0 %v2346
  %2902 = vmatprep.mubr.bf16.mxu0 %v1125
  %2903 = vmatmul.mubr.bf16.gmra.mrb[0].mxu0 %v1124
  %v2904 = vpop.f32.mrb[0].mxu0
  %v2905 = vadd.f32 %v2864, %v2904
  %v2906 = vpop.f32.mrb[0].mxu0
  %v2907 = vpop.f32.mrb[0].mxu0
  %v2908 = vadd.f32 %v2867, %v2907
  %v2909 = vpop.f32.mrb[0].mxu0
  %2910 = vdwg.mxu0
  %v2911 = vtanh.pop %v2649
  %v2912 = vtanh.pop %v2651
  %v2913 = vtanh.pop %v2735
  %v2914 = vtanh.pop %v2737
  %v2915 = vtanh.pop %v2821
  %v2916 = vtanh.pop %v2823
  %v2917 = vtanh.pop %v2905
  %v2918 = vtanh.pop %v2653
  %v2919 = vtanh.pop %v2655
  %v2920 = vtanh.pop %v2739
  %v2921 = vtanh.pop %v2741
  %v2922 = vtanh.pop %v2825
  %v2923 = vtanh.pop %v2827
  %v2924 = vtanh.pop %v2908
  %2925 = vst [vmem:[%s13] sm:$0xff] %v2911
  %2926 = vst [vmem:[%s13 + $0x8] sm:$0xff] %v2912
  %2927 = vst [vmem:[%s13 + $0x10] sm:$0xff] %v2913
  %2928 = vst [vmem:[%s13 + $0x18] sm:$0xff] %v2914
  %2929 = vst [vmem:[%s13 + $0x20] sm:$0xff] %v2915
  %2930 = vst [vmem:[%s13 + $0x28] sm:$0xff] %v2916
  %2931 = vst [vmem:[%s13 + $0x30] sm:$0xff] %v2917
  %2932 = vst [vmem:[%s13 + $0x38] sm:$0xff] %v2918
  %2933 = vst [vmem:[%s13 + $0x40] sm:$0xff] %v2919
  %2934 = vst [vmem:[%s13 + $0x48] sm:$0xff] %v2920
  %2935 = vst [vmem:[%s13 + $0x50] sm:$0xff] %v2921
  %2936 = vst [vmem:[%s13 + $0x58] sm:$0xff] %v2922
  %2937 = vst [vmem:[%s13 + $0x60] sm:$0xff] %v2923
  %2938 = vst [vmem:[%s13 + $0x68] sm:$0xff] %v2924
  // Predicated region
  $region54: #{generator_forward.1} parent=0 // pred_check
    _
  $region55: #{generator_forward.1} parent=0 // pred_check_branch
    %2940 = sbr.rel (0) target = $region57
  $region56: #{generator_forward.1} parent=0 // pred_region
    _
  $region57: #{generator_forward.1} parent=0 // pred_fallthru
    _
  // Predicated region
  $region58: #{generator_forward.1} parent=0 // pred_check
    _
  $region59: #{generator_forward.1} parent=0 // pred_check_branch
    %2942 = sbr.rel (0) target = $region61
  $region60: #{generator_forward.1} parent=0 // pred_region
    _
  $region61: #{generator_forward.1} parent=0 // pred_fallthru
    _

</llo_original>
